<compile_context>
chip_gen: v7x
topology: tpu7x:2x2x1
jax: 0.10.0
libtpu: 0.0.40
codegen_flags: <defaults>
</compile_context>

<pallas_src>
import jax
import jax.numpy as jnp
from jax.experimental import pallas as pl
from jax.experimental.pallas import tpu as pltpu


# ----------------------------------------------------------------------------
# Pallas kernel: one grid step = one 128-node chunk (16 graphs).
# ----------------------------------------------------------------------------
def gcn_net_kernel(adj_ref, x_ref,
                   w1_ref, b1_ref,
                   w2_ref, b2_ref,
                   w3_ref, b3_ref,
                   pool_ref, wf_ref, bfc_ref,
                   o_ref):
    f32 = jnp.float32
    bf16 = jnp.bfloat16

    adj = adj_ref[0]            # (CN, CN)  bf16 normalized adjacency block
    x = x_ref[0]                # (CN, F)   bf16 node features of this chunk

    # conv1: relu( (Ahat @ X) @ W1 + b1 )   -- reordered: inner width F < n1
    agg = jnp.dot(adj, x, preferred_element_type=f32)
    h = jnp.dot(agg.astype(bf16), w1_ref[...], preferred_element_type=f32)
    h = jnp.maximum(h + b1_ref[...], 0.0)

    # conv2: relu( Ahat @ (H @ W2) + b2 )
    hw = jnp.dot(h.astype(bf16), w2_ref[...], preferred_element_type=f32)
    h = jnp.dot(adj, hw.astype(bf16), preferred_element_type=f32)
    h = jnp.maximum(h + b2_ref[...], 0.0)

    # conv3: Ahat @ (H @ W3) + b3   (no relu; n3 <= n2 so project first)
    hw = jnp.dot(h.astype(bf16), w3_ref[...], preferred_element_type=f32)
    h = jnp.dot(adj, hw.astype(bf16), preferred_element_type=f32) + b3_ref[...]

    # global_mean_pool over this chunk's graphs -> (GPC, n3)
    g = jnp.dot(pool_ref[0], h.astype(bf16), preferred_element_type=f32)

    # dropout(p=0.25): inference mode -> identity
    # TODO(synk): training-mode dropout would use pltpu.prng_seed/prng_random_bits.

    # fc: wf is zero-padded to 128 lanes on the host (real output in column 0);
    # fc bias is a scalar read from SMEM.
    o_ref[...] = jnp.dot(g.astype(bf16), wf_ref[...],
                         preferred_element_type=f32) + bfc_ref[0, 0]


def net_forward_pallas(adj_chunks, x_chunks, pool_chunks, params_dev):
    """adj_chunks (C,CN,CN) bf16, x_chunks (C,CN,F) bf16, pool_chunks (C,GPC,CN) bf16."""
    w1, b1, w2, b2, w3, b3, wf_pad, b_fc = params_dev
    num_chunks, cn, _ = adj_chunks.shape
    gpc = pool_chunks.shape[1]
    f_in = x_chunks.shape[-1]
    n1, n2, n3 = w1.shape[1], w2.shape[1], w3.shape[1]
    out_w = wf_pad.shape[1]
    num_graphs = num_chunks * gpc

    flops = 2 * num_chunks * (
        cn * cn * f_in + cn * f_in * n1          # conv1 (reordered)
        + cn * n1 * n2 + cn * cn * n2            # conv2
        + cn * n2 * n3 + cn * cn * n3            # conv3
        + gpc * cn * n3                          # mean pool
        + gpc * n3 * out_w)                      # fc
    bytes_accessed = sum(int(a.size) * a.dtype.itemsize for a in
                         (adj_chunks, x_chunks, pool_chunks,
                          w1, b1, w2, b2, w3, b3, wf_pad, b_fc))
    bytes_accessed += num_graphs * out_w * 4     # f32 output slab

    in_specs = [
        pl.BlockSpec((1, cn, cn), lambda c: (c, 0, 0)),      # adj chunk (bf16)
        pl.BlockSpec((1, cn, f_in), lambda c: (c, 0, 0)),    # x chunk   (bf16)
        pl.BlockSpec((f_in, n1), lambda c: (0, 0)),          # w1 (resident)
        pl.BlockSpec((1, n1), lambda c: (0, 0)),             # b1 (f32)
        pl.BlockSpec((n1, n2), lambda c: (0, 0)),            # w2
        pl.BlockSpec((1, n2), lambda c: (0, 0)),             # b2
        pl.BlockSpec((n2, n3), lambda c: (0, 0)),            # w3
        pl.BlockSpec((1, n3), lambda c: (0, 0)),             # b3
        pl.BlockSpec((1, gpc, cn), lambda c: (c, 0, 0)),     # pool chunk
        pl.BlockSpec((n3, out_w), lambda c: (0, 0)),         # wf padded to 128
        pl.BlockSpec(memory_space=pltpu.MemorySpace.SMEM),   # fc bias scalar
    ]
    out_spec = pl.BlockSpec((gpc, out_w), lambda c: (c, 0))  # lane-dense slab

    out = pl.pallas_call(
        gcn_net_kernel,
        out_shape=jax.ShapeDtypeStruct((num_graphs, out_w), jnp.float32),
        grid=(num_chunks,),
        in_specs=in_specs,
        out_specs=out_spec,
        compiler_params=pltpu.CompilerParams(
            dimension_semantics=("parallel",),
            vmem_limit_bytes=32 * 1024 * 1024),
        cost_estimate=pl.CostEstimate(flops=int(flops), transcendentals=0,
                                      bytes_accessed=int(bytes_accessed)),
    )(adj_chunks, x_chunks, w1, b1, w2, b2, w3, b3, pool_chunks, wf_pad, b_fc)

    return out[:, :1]   # real fc output lives in column 0


# ----------------------------------------------------------------------------
# Glue (plain JAX): GCN-normalized dense adjacency and mean-pool matrix.
# Matches PyG GCNConv defaults: add_self_loops=True,
#   Ahat = D^{-1/2} (A + I) D^{-1/2}.
# ----------------------------------------------------------------------------
def build_norm_adj(edge_index, num_nodes):
    src, dst = edge_index[0], edge_index[1]
    a = jnp.zeros((num_nodes, num_nodes), jnp.float32).at[dst, src].add(1.0)
    a = a + jnp.eye(num_nodes, dtype=jnp.float32)      # self loops
    deg = a.sum(axis=1)
    dinv = jnp.where(deg > 0, 1.0 / jnp.sqrt(deg), 0.0)
    return dinv[:, None] * a * dinv[None, :]


def build_mean_pool(batch, num_graphs):
    onehot = (batch[None, :] == jnp.arange(num_graphs)[:, None]).astype(jnp.float32)
    counts = jnp.maximum(onehot.sum(axis=1, keepdims=True), 1.0)
    return onehot / counts                              # (G, N)


# ----------------------------------------------------------------------------
# Pure-JAX reference mirroring the kernel's mixed precision (bf16 operands,
# f32 accumulation), computed on the FULL dense adjacency / pool matrices so
# it also validates the block-diagonal chunking.
# ----------------------------------------------------------------------------
def net_forward_ref(adj_full, x, params, pool_full):
    (w1, b1), (w2, b2), (w3, b3), (wf, b_fc) = params

    def mm(a, b):
        return jnp.dot(a.astype(jnp.bfloat16), b.astype(jnp.bfloat16),
                       preferred_element_type=jnp.float32)

    h = jnp.maximum(mm(mm(adj_full, x), w1) + b1, 0.0)
    h = jnp.maximum(mm(adj_full, mm(h, w2)) + b2, 0.0)
    h = mm(adj_full, mm(h, w3)) + b3
    g = mm(pool_full, h)
    return mm(g, wf) + b_fc


# ----------------------------------------------------------------------------
# Main
# ----------------------------------------------------------------------------
if __name__ == "__main__":
    NPG = 8                         # nodes per graph
    NUM_GRAPHS = 64                 # batch of graphs in one pallas_call
    N = NUM_GRAPHS * NPG            # 512 nodes total
    F_IN = 16
    N1, N2, N3 = 128, 128, 64       # hidden widths (lane-friendly)
    CN = 128                        # nodes per chunk (= one grid step)
    GPC = CN // NPG                 # graphs per chunk = 16
    NUM_CHUNKS = N // CN            # 4
    OUT_W = 128                     # lane-dense fc output width (col 0 is real)

    key = jax.random.PRNGKey(0)
    k_x, k_w1, k_b1, k_w2, k_b2, k_w3, k_b3, k_wf, k_bf = jax.random.split(key, 9)

    # Node features.
    x = jax.random.normal(k_x, (N, F_IN), jnp.float32)

    # 64 disjoint ring graphs (bidirectional edges); graph g owns nodes
    # [g*NPG, (g+1)*NPG), so 16 consecutive graphs fill one 128-node chunk.
    base = (jnp.arange(NUM_GRAPHS) * NPG)[:, None]
    local = jnp.arange(NPG)[None, :]
    u = (base + local).reshape(-1)
    v = (base + (local + 1) % NPG).reshape(-1)
    edge_index = jnp.stack([jnp.concatenate([u, v]),
                            jnp.concatenate([v, u])]).astype(jnp.int32)
    batch = jnp.repeat(jnp.arange(NUM_GRAPHS, dtype=jnp.int32), NPG)

    # Deterministic synthetic parameters (GCNConv(-1, n1) lazily binds F_IN).
    params = (
        (jax.random.normal(k_w1, (F_IN, N1), jnp.float32) * 0.2,
         jax.random.normal(k_b1, (1, N1), jnp.float32) * 0.05),
        (jax.random.normal(k_w2, (N1, N2), jnp.float32) * 0.2,
         jax.random.normal(k_b2, (1, N2), jnp.float32) * 0.05),
        (jax.random.normal(k_w3, (N2, N3), jnp.float32) * 0.2,
         jax.random.normal(k_b3, (1, N3), jnp.float32) * 0.05),
        (jax.random.normal(k_wf, (N3, 1), jnp.float32) * 0.2,
         jax.random.normal(k_bf, (1, 1), jnp.float32) * 0.05),
    )
    (w1, b1), (w2, b2), (w3, b3), (wf, b_fc) = params

    adj_full = build_norm_adj(edge_index, N)           # (N, N), block diagonal
    pool_full = build_mean_pool(batch, NUM_GRAPHS)     # (G, N)

    # Chunk the block-diagonal structure for the gridded kernel.
    adj_chunks = jnp.stack([adj_full[c * CN:(c + 1) * CN, c * CN:(c + 1) * CN]
                            for c in range(NUM_CHUNKS)])
    pool_chunks = jnp.stack([pool_full[c * GPC:(c + 1) * GPC, c * CN:(c + 1) * CN]
                             for c in range(NUM_CHUNKS)])
    x_chunks = x.reshape(NUM_CHUNKS, CN, F_IN)

    # Lane-dense fc weight (real column 0, rest zero); biases stay f32.
    wf_pad = jnp.zeros((N3, OUT_W), jnp.float32).at[:, 0].set(wf[:, 0])

    bf16 = jnp.bfloat16
    params_dev = (w1.astype(bf16), b1, w2.astype(bf16), b2, w3.astype(bf16), b3,
                  wf_pad.astype(bf16), b_fc)

    out = net_forward_pallas(adj_chunks.astype(bf16),
                             x_chunks.astype(bf16),
                             pool_chunks.astype(bf16),
                             params_dev)
    out = jax.block_until_ready(out)

    ref = net_forward_ref(adj_full, x, params, pool_full)
    assert out.shape == (NUM_GRAPHS, 1), out.shape
    assert jnp.allclose(out, ref, atol=2e-3, rtol=2e-3), (out, ref)

    print("KERNEL_OK")
</pallas_src>

<mosaic_0001>
module attributes {stable_mosaic.version = 11 : i64} {
  func.func @gcn_net_kernel(%arg0: i32, %arg1: memref<1x128x128xbf16, #tpu.memory_space<vmem>>, %arg2: memref<1x128x16xbf16, #tpu.memory_space<vmem>>, %arg3: memref<16x128xbf16, #tpu.memory_space<vmem>>, %arg4: memref<1x128xf32, #tpu.memory_space<vmem>>, %arg5: memref<128x128xbf16, #tpu.memory_space<vmem>>, %arg6: memref<1x128xf32, #tpu.memory_space<vmem>>, %arg7: memref<128x64xbf16, #tpu.memory_space<vmem>>, %arg8: memref<1x64xf32, #tpu.memory_space<vmem>>, %arg9: memref<1x16x128xbf16, #tpu.memory_space<vmem>>, %arg10: memref<64x128xbf16, #tpu.memory_space<vmem>>, %arg11: memref<1x1xf32, #tpu.memory_space<smem>>, %arg12: memref<16x128xf32, #tpu.memory_space<vmem>>) attributes {dimension_semantics = [#tpu.dimension_semantics<parallel>], iteration_bounds = array<i64: 4>, scalar_prefetch = 0 : i64, scratch_operands = 0 : i64, tpu.core_type = #tpu.core_type<tc>, window_params = [{transform_indices = @transform_0, window_bounds = array<i64: 1, 128, 128>}, {transform_indices = @transform_1, window_bounds = array<i64: 1, 128, 16>}, {pipeline_mode = #tpu.pipeline_mode<synchronous>, transform_indices = @transform_2, window_bounds = array<i64: 16, 128>}, {pipeline_mode = #tpu.pipeline_mode<synchronous>, transform_indices = @transform_3, window_bounds = array<i64: 1, 128>}, {pipeline_mode = #tpu.pipeline_mode<synchronous>, transform_indices = @transform_4, window_bounds = array<i64: 128, 128>}, {pipeline_mode = #tpu.pipeline_mode<synchronous>, transform_indices = @transform_5, window_bounds = array<i64: 1, 128>}, {pipeline_mode = #tpu.pipeline_mode<synchronous>, transform_indices = @transform_6, window_bounds = array<i64: 128, 64>}, {pipeline_mode = #tpu.pipeline_mode<synchronous>, transform_indices = @transform_7, window_bounds = array<i64: 1, 64>}, {transform_indices = @transform_8, window_bounds = array<i64: 1, 16, 128>}, {pipeline_mode = #tpu.pipeline_mode<synchronous>, transform_indices = @transform_9, window_bounds = array<i64: 64, 128>}, {transform_indices = @transform_10, window_bounds = array<i64: 1, 1>}, {transform_indices = @transform_11, window_bounds = array<i64: 16, 128>}]} {
    %c0 = arith.constant 0 : index
    %c0_0 = arith.constant 0 : index
    %c0_1 = arith.constant 0 : index
    %0 = vector.load %arg1[%c0, %c0_0, %c0_1] : memref<1x128x128xbf16, #tpu.memory_space<vmem>>, vector<1x128x128xbf16>
    %1 = vector.shape_cast %0 : vector<1x128x128xbf16> to vector<128x128xbf16>
    %c0_2 = arith.constant 0 : index
    %c0_3 = arith.constant 0 : index
    %c0_4 = arith.constant 0 : index
    %2 = vector.load %arg2[%c0_2, %c0_3, %c0_4] : memref<1x128x16xbf16, #tpu.memory_space<vmem>>, vector<1x128x16xbf16>
    %3 = vector.shape_cast %2 : vector<1x128x16xbf16> to vector<128x16xbf16>
    %cst = arith.constant dense<0.000000e+00> : vector<128x16xf32>
    %4 = tpu.matmul %1, %3, %cst {dimension_numbers = #tpu.dot_dimension_numbers<[1], [0], [0], [1], [0, 0, 1, 1], [], []>} : vector<128x128xbf16>, vector<128x16xbf16>, vector<128x16xf32> -> vector<128x16xf32>
    %5 = arith.truncf %4 : vector<128x16xf32> to vector<128x16xbf16>
    %c0_5 = arith.constant 0 : index
    %c0_6 = arith.constant 0 : index
    %6 = vector.load %arg3[%c0_5, %c0_6] : memref<16x128xbf16, #tpu.memory_space<vmem>>, vector<16x128xbf16>
    %cst_7 = arith.constant dense<0.000000e+00> : vector<128x128xf32>
    %7 = tpu.matmul %5, %6, %cst_7 {dimension_numbers = #tpu.dot_dimension_numbers<[1], [0], [0], [1], [0, 0, 1, 1], [], []>} : vector<128x16xbf16>, vector<16x128xbf16>, vector<128x128xf32> -> vector<128x128xf32>
    %c0_8 = arith.constant 0 : index
    %c0_9 = arith.constant 0 : index
    %8 = vector.load %arg4[%c0_8, %c0_9] : memref<1x128xf32, #tpu.memory_space<vmem>>, vector<1x128xf32>
    %9 = vector.broadcast %8 : vector<1x128xf32> to vector<128x128xf32>
    %10 = arith.addf %7, %9 : vector<128x128xf32>
    %cst_10 = arith.constant 0.000000e+00 : f32
    %11 = vector.broadcast %cst_10 : f32 to vector<128x128xf32>
    %12 = arith.maximumf %10, %11 : vector<128x128xf32>
    %13 = arith.truncf %12 : vector<128x128xf32> to vector<128x128xbf16>
    %c0_11 = arith.constant 0 : index
    %c0_12 = arith.constant 0 : index
    %14 = vector.load %arg5[%c0_11, %c0_12] : memref<128x128xbf16, #tpu.memory_space<vmem>>, vector<128x128xbf16>
    %cst_13 = arith.constant dense<0.000000e+00> : vector<128x128xf32>
    %15 = tpu.matmul %13, %14, %cst_13 {dimension_numbers = #tpu.dot_dimension_numbers<[1], [0], [0], [1], [0, 0, 1, 1], [], []>} : vector<128x128xbf16>, vector<128x128xbf16>, vector<128x128xf32> -> vector<128x128xf32>
    %16 = arith.truncf %15 : vector<128x128xf32> to vector<128x128xbf16>
    %cst_14 = arith.constant dense<0.000000e+00> : vector<128x128xf32>
    %17 = tpu.matmul %1, %16, %cst_14 {dimension_numbers = #tpu.dot_dimension_numbers<[1], [0], [0], [1], [0, 0, 1, 1], [], []>} : vector<128x128xbf16>, vector<128x128xbf16>, vector<128x128xf32> -> vector<128x128xf32>
    %c0_15 = arith.constant 0 : index
    %c0_16 = arith.constant 0 : index
    %18 = vector.load %arg6[%c0_15, %c0_16] : memref<1x128xf32, #tpu.memory_space<vmem>>, vector<1x128xf32>
    %19 = vector.broadcast %18 : vector<1x128xf32> to vector<128x128xf32>
    %20 = arith.addf %17, %19 : vector<128x128xf32>
    %cst_17 = arith.constant 0.000000e+00 : f32
    %21 = vector.broadcast %cst_17 : f32 to vector<128x128xf32>
    %22 = arith.maximumf %20, %21 : vector<128x128xf32>
    %23 = arith.truncf %22 : vector<128x128xf32> to vector<128x128xbf16>
    %c0_18 = arith.constant 0 : index
    %c0_19 = arith.constant 0 : index
    %24 = vector.load %arg7[%c0_18, %c0_19] : memref<128x64xbf16, #tpu.memory_space<vmem>>, vector<128x64xbf16>
    %cst_20 = arith.constant dense<0.000000e+00> : vector<128x64xf32>
    %25 = tpu.matmul %23, %24, %cst_20 {dimension_numbers = #tpu.dot_dimension_numbers<[1], [0], [0], [1], [0, 0, 1, 1], [], []>} : vector<128x128xbf16>, vector<128x64xbf16>, vector<128x64xf32> -> vector<128x64xf32>
    %26 = arith.truncf %25 : vector<128x64xf32> to vector<128x64xbf16>
    %cst_21 = arith.constant dense<0.000000e+00> : vector<128x64xf32>
    %27 = tpu.matmul %1, %26, %cst_21 {dimension_numbers = #tpu.dot_dimension_numbers<[1], [0], [0], [1], [0, 0, 1, 1], [], []>} : vector<128x128xbf16>, vector<128x64xbf16>, vector<128x64xf32> -> vector<128x64xf32>
    %c0_22 = arith.constant 0 : index
    %c0_23 = arith.constant 0 : index
    %28 = vector.load %arg8[%c0_22, %c0_23] : memref<1x64xf32, #tpu.memory_space<vmem>>, vector<1x64xf32>
    %29 = vector.broadcast %28 : vector<1x64xf32> to vector<128x64xf32>
    %30 = arith.addf %27, %29 : vector<128x64xf32>
    %c0_24 = arith.constant 0 : index
    %c0_25 = arith.constant 0 : index
    %c0_26 = arith.constant 0 : index
    %31 = vector.load %arg9[%c0_24, %c0_25, %c0_26] : memref<1x16x128xbf16, #tpu.memory_space<vmem>>, vector<1x16x128xbf16>
    %32 = vector.shape_cast %31 : vector<1x16x128xbf16> to vector<16x128xbf16>
    %33 = arith.truncf %30 : vector<128x64xf32> to vector<128x64xbf16>
    %cst_27 = arith.constant dense<0.000000e+00> : vector<16x64xf32>
    %34 = tpu.matmul %32, %33, %cst_27 {dimension_numbers = #tpu.dot_dimension_numbers<[1], [0], [0], [1], [0, 0, 1, 1], [], []>} : vector<16x128xbf16>, vector<128x64xbf16>, vector<16x64xf32> -> vector<16x64xf32>
    %35 = arith.truncf %34 : vector<16x64xf32> to vector<16x64xbf16>
    %c0_28 = arith.constant 0 : index
    %c0_29 = arith.constant 0 : index
    %36 = vector.load %arg10[%c0_28, %c0_29] : memref<64x128xbf16, #tpu.memory_space<vmem>>, vector<64x128xbf16>
    %cst_30 = arith.constant dense<0.000000e+00> : vector<16x128xf32>
    %37 = tpu.matmul %35, %36, %cst_30 {dimension_numbers = #tpu.dot_dimension_numbers<[1], [0], [0], [1], [0, 0, 1, 1], [], []>} : vector<16x64xbf16>, vector<64x128xbf16>, vector<16x128xf32> -> vector<16x128xf32>
    %c0_31 = arith.constant 0 : index
    %c0_32 = arith.constant 0 : index
    %38 = memref.load %arg11[%c0_31, %c0_32] : memref<1x1xf32, #tpu.memory_space<smem>>
    %39 = vector.broadcast %38 : f32 to vector<16x128xf32>
    %40 = arith.addf %37, %39 : vector<16x128xf32>
    %c0_33 = arith.constant 0 : index
    %c0_34 = arith.constant 0 : index
    %41 = vector.load %arg12[%c0_33, %c0_34] : memref<16x128xf32, #tpu.memory_space<vmem>>, vector<16x128xf32>
    tpu.vector_store %arg12[%c0_33, %c0_34], %40 {strides = array<i32>} : memref<16x128xf32, #tpu.memory_space<vmem>>, vector<16x128xf32>,
    return
  }
  func.func @transform_0(%arg0: i32) -> (i32, i32, i32) {
    %c0_i32 = arith.constant 0 : i32
    %c0_i32_0 = arith.constant 0 : i32
    %c0_i32_1 = arith.constant 0 : i32
    return %arg0, %c0_i32, %c0_i32_0 : i32, i32, i32
  }
  func.func @transform_1(%arg0: i32) -> (i32, i32, i32) {
    %c0_i32 = arith.constant 0 : i32
    %c0_i32_0 = arith.constant 0 : i32
    %c0_i32_1 = arith.constant 0 : i32
    return %arg0, %c0_i32, %c0_i32_0 : i32, i32, i32
  }
  func.func @transform_2(%arg0: i32) -> (i32, i32) {
    %c0_i32 = arith.constant 0 : i32
    %c0_i32_0 = arith.constant 0 : i32
    %c0_i32_1 = arith.constant 0 : i32
    return %c0_i32, %c0_i32_0 : i32, i32
  }
  func.func @transform_3(%arg0: i32) -> (i32, i32) {
    %c0_i32 = arith.constant 0 : i32
    %c0_i32_0 = arith.constant 0 : i32
    %c0_i32_1 = arith.constant 0 : i32
    return %c0_i32, %c0_i32_0 : i32, i32
  }
  func.func @transform_4(%arg0: i32) -> (i32, i32) {
    %c0_i32 = arith.constant 0 : i32
    %c0_i32_0 = arith.constant 0 : i32
    %c0_i32_1 = arith.constant 0 : i32
    return %c0_i32, %c0_i32_0 : i32, i32
  }
  func.func @transform_5(%arg0: i32) -> (i32, i32) {
    %c0_i32 = arith.constant 0 : i32
    %c0_i32_0 = arith.constant 0 : i32
    %c0_i32_1 = arith.constant 0 : i32
    return %c0_i32, %c0_i32_0 : i32, i32
  }
  func.func @transform_6(%arg0: i32) -> (i32, i32) {
    %c0_i32 = arith.constant 0 : i32
    %c0_i32_0 = arith.constant 0 : i32
    %c0_i32_1 = arith.constant 0 : i32
    return %c0_i32, %c0_i32_0 : i32, i32
  }
  func.func @transform_7(%arg0: i32) -> (i32, i32) {
    %c0_i32 = arith.constant 0 : i32
    %c0_i32_0 = arith.constant 0 : i32
    %c0_i32_1 = arith.constant 0 : i32
    return %c0_i32, %c0_i32_0 : i32, i32
  }
  func.func @transform_8(%arg0: i32) -> (i32, i32, i32) {
    %c0_i32 = arith.constant 0 : i32
    %c0_i32_0 = arith.constant 0 : i32
    %c0_i32_1 = arith.constant 0 : i32
    return %arg0, %c0_i32, %c0_i32_0 : i32, i32, i32
  }
  func.func @transform_9(%arg0: i32) -> (i32, i32) {
    %c0_i32 = arith.constant 0 : i32
    %c0_i32_0 = arith.constant 0 : i32
    %c0_i32_1 = arith.constant 0 : i32
    return %c0_i32, %c0_i32_0 : i32, i32
  }
  func.func @transform_10(%arg0: i32) -> (i32, i32) {
    %c0_i32 = arith.constant 0 : i32
    %c0_i32_0 = arith.constant 0 : i32
    %c0_i32_1 = arith.constant 0 : i32
    return %c0_i32, %c0_i32_0 : i32, i32
  }
  func.func @transform_11(%arg0: i32) -> (i32, i32) {
    %c0_i32 = arith.constant 0 : i32
    %c0_i32_0 = arith.constant 0 : i32
    return %arg0, %c0_i32 : i32, i32
  }
}

</mosaic_0001>

<llo_original>
// kernel: tpu_custom_call.1
$region0: #{tpu_custom_call.1}
  #allocation0 [shape = 'u32[]', space=smem, size = 0x4, offset = 0x4, fixed_abs, tag = 'smem constant byte address 0x4 - core index']
  #allocation1 [shape = 'u32[144,128]{1,0:T(1,128)}', space=vmem, size = 0x12000, scoped, tag = 'internal scratch']
  #allocation2 [shape = 'f32[1,1]{1,0:T(1,128)S(6)}', space=smem, size = 0x200, scoped, tag = 'scoped memory for tpu_custom_call.1']
  %s0 = inlined_call_operand.vmem [shape: bf16[4,128,128], index: 0, kind: input, shape index: {}]
  %s1 = inlined_call_operand.vmem [shape: bf16[4,128,16], index: 1, kind: input, shape index: {}]
  %s2 = inlined_call_operand.hbm [shape: bf16[16,128], index: 2, kind: input, shape index: {}]
  %s3 = inlined_call_operand.vmem [shape: f32[1,128], index: 3, kind: input, shape index: {}]
  %s4 = inlined_call_operand.vmem [shape: bf16[128,128], index: 4, kind: input, shape index: {}]
  %s5 = inlined_call_operand.vmem [shape: f32[1,128], index: 5, kind: input, shape index: {}]
  %s6 = inlined_call_operand.vmem [shape: bf16[128,64], index: 6, kind: input, shape index: {}]
  %s7 = inlined_call_operand.vmem [shape: f32[1,64], index: 7, kind: input, shape index: {}]
  %s8 = inlined_call_operand.vmem [shape: bf16[4,16,128], index: 8, kind: input, shape index: {}]
  %s9 = inlined_call_operand.vmem [shape: bf16[64,128], index: 9, kind: input, shape index: {}]
  %s10 = inlined_call_operand.<no memory space> [shape: f32[1,1], index: 10, kind: input, shape index: {}]
  %s11 = inlined_call_operand.hbm [shape: f32[64,128], index: 11, kind: output, shape index: {}]
  %s12 = sld [smem:[#allocation0]]
  $region81: #{tpu_custom_call.1} parent=0
    _
  %s14 = ssub.s32 1, %s12
  %s15 = scalar_select 0, %s14, %s12
  %16 = sst [smem:[#allocation2]] %s10
  $region1: #{tpu_custom_call.1} parent=0
    #allocation3 [shape = 'u8[4096]{0}', space=vmem, size = 0x1000, scoped, tag = 'input window, operand 2, single buffered']
    #allocation4 [shape = 's32[2]{0}', space=sflag, size = 0x8, scoped, tag = 'scoped memory for tpu_custom_call.1']
    #allocation5 [shape = 's32[2]{0}', space=sflag, size = 0x8, scoped, tag = 'scoped memory for tpu_custom_call.1']
    #allocation6 [shape = 'u8[16384]{0}', space=vmem, size = 0x4000, scoped, tag = 'output window, operand 0']
    %17 = vsyncpa [#allocation4], 0
    %18 = vsyncpa [#allocation5], 0
    %s19 = scalar_lea.sflag [#allocation5], 1
    %20 = vsyncpa %s19, 0
    loop: start=0, step=1, limit=6
    $region2: #{tpu_custom_call.1} parent=1 // loop_pre_header
      _
    $region3: #{tpu_custom_call.1} parent=1 // loop_header
      %s22 = sphi 0, %s26
      %p23 = scmp.ge.s32.totalorder %s22, 6
      %s32 = sphi 0, %s34
      %s35 = sphi 0, %s32
      %s36 = sphi 0, %s35
      %s52 = sphi 0, %s36
      %s58 = sphi 0, %s60
      %s61 = sphi 0, %s58
      %s62 = sphi 0, %s61
      %s78 = sphi 0, %s62
      %s82 = sphi 0, %s82
      %s84 = sphi 0, %s82
      %s85 = sphi 0, %s84
      %s99 = sphi 0, %s85
      %s103 = sphi 0, %s103
      %s105 = sphi 0, %s103
      %s106 = sphi 0, %s105
      %s120 = sphi 0, %s106
      %s124 = sphi 0, %s124
      %s126 = sphi 0, %s124
      %s127 = sphi 0, %s126
      %s141 = sphi 0, %s127
      %s145 = sphi 0, %s145
      %s147 = sphi 0, %s145
      %s148 = sphi 0, %s147
      %s162 = sphi 0, %s148
      %s166 = sphi 0, %s166
      %s168 = sphi 0, %s166
      %s169 = sphi 0, %s168
      %s183 = sphi 0, %s169
      %s187 = sphi 0, %s187
      %s189 = sphi 0, %s187
      %s190 = sphi 0, %s189
      %s204 = sphi 0, %s190
      %s210 = sphi 0, %s212
      %s213 = sphi 0, %s210
      %s214 = sphi 0, %s213
      %s230 = sphi 0, %s214
      %s234 = sphi 0, %s234
      %s236 = sphi 0, %s234
      %s237 = sphi 0, %s236
      %s251 = sphi 0, %s237
      %s255 = sphi 0, %s255
      %s257 = sphi 0, %s255
      %s258 = sphi 0, %s257
      %s272 = sphi 0, %s258
      %s278 = sphi 0, %s280
      %s281 = sphi 0, %s278
      %s282 = sphi 0, %s281
      %s298 = sphi 0, %s282
    $region4: #{tpu_custom_call.1} parent=1 // loop_header_branch
      %25 = sbr.rel (%p23) target = $region8
    $region5: #{tpu_custom_call.1} parent=1 // loop_body
      %s27 = ssub.s32 %s22, 1
      %s28 = ssub.s32 %s22, 2
      %s29 = sadd.s32 %s22, 1
      %s30 = ssub.s32 %s22, %s29
      %p31 = scmp.eq.s32.totalorder %s30, 0
      %s33 = sadd.s32 %s32, 1
      %s34 = scalar_select %p31, %s32, %s33
      %p37 = pneg %p31
      %p38 = scmp.eq.s32.totalorder %s22, 3
      %p39 = por %p37, %p38
      %p40 = scmp.ne.s32.totalorder %s32, %s35
      %p41 = scmp.eq.s32.totalorder %s22, 0
      %p42 = por %p40, %p41
      %p43 = scmp.ne.s32.totalorder %s32, %s35
      %p44 = scmp.eq.s32.totalorder %s27, 3
      %p45 = por %p43, %p44
      %p46 = scmp.ne.s32.totalorder %s35, %s36
      %p47 = scmp.eq.s32.totalorder %s27, 0
      %p48 = por %p46, %p47
      %p49 = scmp.ne.s32.totalorder %s35, %s36
      %p50 = scmp.eq.s32.totalorder %s28, 3
      %p51 = por %p49, %p50
      %p53 = scmp.ne.s32.totalorder %s36, %s52
      %p54 = scmp.eq.s32.totalorder %s28, 0
      %p55 = por %p53, %p54
      %s56 = ssub.s32 %s22, %s29
      %p57 = scmp.eq.s32.totalorder %s56, 0
      %s59 = sadd.s32 %s58, 1
      %s60 = scalar_select %p57, %s58, %s59
      %p63 = pneg %p57
      %p64 = scmp.eq.s32.totalorder %s22, 3
      %p65 = por %p63, %p64
      %p66 = scmp.ne.s32.totalorder %s58, %s61
      %p67 = scmp.eq.s32.totalorder %s22, 0
      %p68 = por %p66, %p67
      %p69 = scmp.ne.s32.totalorder %s58, %s61
      %p70 = scmp.eq.s32.totalorder %s27, 3
      %p71 = por %p69, %p70
      %p72 = scmp.ne.s32.totalorder %s61, %s62
      %p73 = scmp.eq.s32.totalorder %s27, 0
      %p74 = por %p72, %p73
      %p75 = scmp.ne.s32.totalorder %s61, %s62
      %p76 = scmp.eq.s32.totalorder %s28, 3
      %p77 = por %p75, %p76
      %p79 = scmp.ne.s32.totalorder %s62, %s78
      %p80 = scmp.eq.s32.totalorder %s28, 0
      %p81 = por %p79, %p80
      %s83 = sadd.s32 %s82, 1
      %p86 = scmp.eq.s32.totalorder %s22, 3
      %p87 = scmp.ne.s32.totalorder %s82, %s84
      %p88 = scmp.eq.s32.totalorder %s22, 0
      %p89 = por %p87, %p88
      %p90 = scmp.ne.s32.totalorder %s82, %s84
      %p91 = scmp.eq.s32.totalorder %s27, 3
      %p92 = por %p90, %p91
      %p93 = scmp.ne.s32.totalorder %s84, %s85
      %p94 = scmp.eq.s32.totalorder %s27, 0
      %p95 = por %p93, %p94
      %p96 = scmp.ne.s32.totalorder %s84, %s85
      %p97 = scmp.eq.s32.totalorder %s28, 3
      %p98 = por %p96, %p97
      %p100 = scmp.ne.s32.totalorder %s85, %s99
      %p101 = scmp.eq.s32.totalorder %s28, 0
      %p102 = por %p100, %p101
      %s104 = sadd.s32 %s103, 1
      %p107 = scmp.eq.s32.totalorder %s22, 3
      %p108 = scmp.ne.s32.totalorder %s103, %s105
      %p109 = scmp.eq.s32.totalorder %s22, 0
      %p110 = por %p108, %p109
      %p111 = scmp.ne.s32.totalorder %s103, %s105
      %p112 = scmp.eq.s32.totalorder %s27, 3
      %p113 = por %p111, %p112
      %p114 = scmp.ne.s32.totalorder %s105, %s106
      %p115 = scmp.eq.s32.totalorder %s27, 0
      %p116 = por %p114, %p115
      %p117 = scmp.ne.s32.totalorder %s105, %s106
      %p118 = scmp.eq.s32.totalorder %s28, 3
      %p119 = por %p117, %p118
      %p121 = scmp.ne.s32.totalorder %s106, %s120
      %p122 = scmp.eq.s32.totalorder %s28, 0
      %p123 = por %p121, %p122
      %s125 = sadd.s32 %s124, 1
      %p128 = scmp.eq.s32.totalorder %s22, 3
      %p129 = scmp.ne.s32.totalorder %s124, %s126
      %p130 = scmp.eq.s32.totalorder %s22, 0
      %p131 = por %p129, %p130
      %p132 = scmp.ne.s32.totalorder %s124, %s126
      %p133 = scmp.eq.s32.totalorder %s27, 3
      %p134 = por %p132, %p133
      %p135 = scmp.ne.s32.totalorder %s126, %s127
      %p136 = scmp.eq.s32.totalorder %s27, 0
      %p137 = por %p135, %p136
      %p138 = scmp.ne.s32.totalorder %s126, %s127
      %p139 = scmp.eq.s32.totalorder %s28, 3
      %p140 = por %p138, %p139
      %p142 = scmp.ne.s32.totalorder %s127, %s141
      %p143 = scmp.eq.s32.totalorder %s28, 0
      %p144 = por %p142, %p143
      %s146 = sadd.s32 %s145, 1
      %p149 = scmp.eq.s32.totalorder %s22, 3
      %p150 = scmp.ne.s32.totalorder %s145, %s147
      %p151 = scmp.eq.s32.totalorder %s22, 0
      %p152 = por %p150, %p151
      %p153 = scmp.ne.s32.totalorder %s145, %s147
      %p154 = scmp.eq.s32.totalorder %s27, 3
      %p155 = por %p153, %p154
      %p156 = scmp.ne.s32.totalorder %s147, %s148
      %p157 = scmp.eq.s32.totalorder %s27, 0
      %p158 = por %p156, %p157
      %p159 = scmp.ne.s32.totalorder %s147, %s148
      %p160 = scmp.eq.s32.totalorder %s28, 3
      %p161 = por %p159, %p160
      %p163 = scmp.ne.s32.totalorder %s148, %s162
      %p164 = scmp.eq.s32.totalorder %s28, 0
      %p165 = por %p163, %p164
      %s167 = sadd.s32 %s166, 1
      %p170 = scmp.eq.s32.totalorder %s22, 3
      %p171 = scmp.ne.s32.totalorder %s166, %s168
      %p172 = scmp.eq.s32.totalorder %s22, 0
      %p173 = por %p171, %p172
      %p174 = scmp.ne.s32.totalorder %s166, %s168
      %p175 = scmp.eq.s32.totalorder %s27, 3
      %p176 = por %p174, %p175
      %p177 = scmp.ne.s32.totalorder %s168, %s169
      %p178 = scmp.eq.s32.totalorder %s27, 0
      %p179 = por %p177, %p178
      %p180 = scmp.ne.s32.totalorder %s168, %s169
      %p181 = scmp.eq.s32.totalorder %s28, 3
      %p182 = por %p180, %p181
      %p184 = scmp.ne.s32.totalorder %s169, %s183
      %p185 = scmp.eq.s32.totalorder %s28, 0
      %p186 = por %p184, %p185
      %s188 = sadd.s32 %s187, 1
      %p191 = scmp.eq.s32.totalorder %s22, 3
      %p192 = scmp.ne.s32.totalorder %s187, %s189
      %p193 = scmp.eq.s32.totalorder %s22, 0
      %p194 = por %p192, %p193
      %p195 = scmp.ne.s32.totalorder %s187, %s189
      %p196 = scmp.eq.s32.totalorder %s27, 3
      %p197 = por %p195, %p196
      %p198 = scmp.ne.s32.totalorder %s189, %s190
      %p199 = scmp.eq.s32.totalorder %s27, 0
      %p200 = por %p198, %p199
      %p201 = scmp.ne.s32.totalorder %s189, %s190
      %p202 = scmp.eq.s32.totalorder %s28, 3
      %p203 = por %p201, %p202
      %p205 = scmp.ne.s32.totalorder %s190, %s204
      %p206 = scmp.eq.s32.totalorder %s28, 0
      %p207 = por %p205, %p206
      %s208 = ssub.s32 %s22, %s29
      %p209 = scmp.eq.s32.totalorder %s208, 0
      %s211 = sadd.s32 %s210, 1
      %s212 = scalar_select %p209, %s210, %s211
      %p215 = pneg %p209
      %p216 = scmp.eq.s32.totalorder %s22, 3
      %p217 = por %p215, %p216
      %p218 = scmp.ne.s32.totalorder %s210, %s213
      %p219 = scmp.eq.s32.totalorder %s22, 0
      %p220 = por %p218, %p219
      %p221 = scmp.ne.s32.totalorder %s210, %s213
      %p222 = scmp.eq.s32.totalorder %s27, 3
      %p223 = por %p221, %p222
      %p224 = scmp.ne.s32.totalorder %s213, %s214
      %p225 = scmp.eq.s32.totalorder %s27, 0
      %p226 = por %p224, %p225
      %p227 = scmp.ne.s32.totalorder %s213, %s214
      %p228 = scmp.eq.s32.totalorder %s28, 3
      %p229 = por %p227, %p228
      %p231 = scmp.ne.s32.totalorder %s214, %s230
      %p232 = scmp.eq.s32.totalorder %s28, 0
      %p233 = por %p231, %p232
      %s235 = sadd.s32 %s234, 1
      %p238 = scmp.eq.s32.totalorder %s22, 3
      %p239 = scmp.ne.s32.totalorder %s234, %s236
      %p240 = scmp.eq.s32.totalorder %s22, 0
      %p241 = por %p239, %p240
      %p242 = scmp.ne.s32.totalorder %s234, %s236
      %p243 = scmp.eq.s32.totalorder %s27, 3
      %p244 = por %p242, %p243
      %p245 = scmp.ne.s32.totalorder %s236, %s237
      %p246 = scmp.eq.s32.totalorder %s27, 0
      %p247 = por %p245, %p246
      %p248 = scmp.ne.s32.totalorder %s236, %s237
      %p249 = scmp.eq.s32.totalorder %s28, 3
      %p250 = por %p248, %p249
      %p252 = scmp.ne.s32.totalorder %s237, %s251
      %p253 = scmp.eq.s32.totalorder %s28, 0
      %p254 = por %p252, %p253
      %s256 = sadd.s32 %s255, 1
      %p259 = scmp.eq.s32.totalorder %s22, 3
      %p260 = scmp.ne.s32.totalorder %s255, %s257
      %p261 = scmp.eq.s32.totalorder %s22, 0
      %p262 = por %p260, %p261
      %p263 = scmp.ne.s32.totalorder %s255, %s257
      %p264 = scmp.eq.s32.totalorder %s27, 3
      %p265 = por %p263, %p264
      %p266 = scmp.ne.s32.totalorder %s257, %s258
      %p267 = scmp.eq.s32.totalorder %s27, 0
      %p268 = por %p266, %p267
      %p269 = scmp.ne.s32.totalorder %s257, %s258
      %p270 = scmp.eq.s32.totalorder %s28, 3
      %p271 = por %p269, %p270
      %p273 = scmp.ne.s32.totalorder %s258, %s272
      %p274 = scmp.eq.s32.totalorder %s28, 0
      %p275 = por %p273, %p274
      %s276 = ssub.s32 %s22, %s29
      %p277 = scmp.eq.s32.totalorder %s276, 0
      %s279 = sadd.s32 %s278, 1
      %s280 = scalar_select %p277, %s278, %s279
      %p283 = pneg %p277
      %p284 = scmp.eq.s32.totalorder %s22, 3
      %p285 = por %p283, %p284
      %p286 = scmp.ne.s32.totalorder %s278, %s281
      %p287 = scmp.eq.s32.totalorder %s22, 0
      %p288 = por %p286, %p287
      %p289 = scmp.ne.s32.totalorder %s278, %s281
      %p290 = scmp.eq.s32.totalorder %s27, 3
      %p291 = por %p289, %p290
      %p292 = scmp.ne.s32.totalorder %s281, %s282
      %p293 = scmp.eq.s32.totalorder %s27, 0
      %p294 = por %p292, %p293
      %p295 = scmp.ne.s32.totalorder %s281, %s282
      %p296 = scmp.eq.s32.totalorder %s28, 3
      %p297 = por %p295, %p296
      %p299 = scmp.ne.s32.totalorder %s282, %s298
      %p300 = scmp.eq.s32.totalorder %s28, 0
      %p301 = por %p299, %p300
      %p302 = scmp.le.s32.totalorder 1, %s22
      %p303 = scmp.lt.s32.totalorder %s22, 5
      %p304 = pnand %p302, %p303
      %p305 = pneg %p304
      // Predicated region
      $region9: #{tpu_custom_call.1} parent=5 // pred_check
        _
      $region10: #{tpu_custom_call.1} parent=5 // pred_check_branch
        %307 = sbr.rel (%p304) target = $region12
      $region11: #{tpu_custom_call.1} parent=5 // pred_region
        %s308 = ssub.s32 %s22, 1
        // Predicated region
        $region13: #{tpu_custom_call.1} parent=11 // pred_check
          %p309 = pneg %p95
        $region14: #{tpu_custom_call.1} parent=11 // pred_check_branch
          %311 = sbr.rel (%p309) target = $region16
        $region15: #{tpu_custom_call.1} parent=11 // pred_region
          %s313 = ssub.s32 128, 128
          %314 = vsyncadd [#allocation4], %s313
          %s315 = sshll.u32 [#allocation3], 4
          %s316 = int_to_ptr.vmem [resolvable:$true] %s315
          %321 = dma.hbm_to_vmem [thread:$0]  %s2, 128, %s316, [#allocation4], 64, 64, 4
        $region16: #{tpu_custom_call.1} parent=11 // pred_fallthru
          _
        // Predicated region
        $region17: #{tpu_custom_call.1} parent=11 // pred_check
          %p322 = pneg %p116
        $region18: #{tpu_custom_call.1} parent=11 // pred_check_branch
          %324 = sbr.rel (%p322) target = $region20
        $region19: #{tpu_custom_call.1} parent=11 // pred_region
          _
        $region20: #{tpu_custom_call.1} parent=11 // pred_fallthru
          _
        // Predicated region
        $region21: #{tpu_custom_call.1} parent=11 // pred_check
          %p325 = pneg %p137
        $region22: #{tpu_custom_call.1} parent=11 // pred_check_branch
          %327 = sbr.rel (%p325) target = $region24
        $region23: #{tpu_custom_call.1} parent=11 // pred_region
          _
        $region24: #{tpu_custom_call.1} parent=11 // pred_fallthru
          _
        // Predicated region
        $region25: #{tpu_custom_call.1} parent=11 // pred_check
          %p328 = pneg %p158
        $region26: #{tpu_custom_call.1} parent=11 // pred_check_branch
          %330 = sbr.rel (%p328) target = $region28
        $region27: #{tpu_custom_call.1} parent=11 // pred_region
          _
        $region28: #{tpu_custom_call.1} parent=11 // pred_fallthru
          _
        // Predicated region
        $region29: #{tpu_custom_call.1} parent=11 // pred_check
          %p331 = pneg %p179
        $region30: #{tpu_custom_call.1} parent=11 // pred_check_branch
          %333 = sbr.rel (%p331) target = $region32
        $region31: #{tpu_custom_call.1} parent=11 // pred_region
          _
        $region32: #{tpu_custom_call.1} parent=11 // pred_fallthru
          _
        // Predicated region
        $region33: #{tpu_custom_call.1} parent=11 // pred_check
          %p334 = pneg %p200
        $region34: #{tpu_custom_call.1} parent=11 // pred_check_branch
          %336 = sbr.rel (%p334) target = $region36
        $region35: #{tpu_custom_call.1} parent=11 // pred_region
          _
        $region36: #{tpu_custom_call.1} parent=11 // pred_fallthru
          _
        // Predicated region
        $region37: #{tpu_custom_call.1} parent=11 // pred_check
          %p337 = pneg %p247
        $region38: #{tpu_custom_call.1} parent=11 // pred_check_branch
          %339 = sbr.rel (%p337) target = $region40
        $region39: #{tpu_custom_call.1} parent=11 // pred_region
          _
        $region40: #{tpu_custom_call.1} parent=11 // pred_fallthru
          _
        // Predicated region
        $region41: #{tpu_custom_call.1} parent=11 // pred_check
          %p340 = pneg %p268
        $region42: #{tpu_custom_call.1} parent=11 // pred_check_branch
          %342 = sbr.rel (%p340) target = $region44
        $region43: #{tpu_custom_call.1} parent=11 // pred_region
          _
        $region44: #{tpu_custom_call.1} parent=11 // pred_fallthru
          _
      $region12: #{tpu_custom_call.1} parent=5 // pred_fallthru
        _
      %p343 = scmp.lt.s32.totalorder %s22, 4
      // Predicated region
      $region45: #{tpu_custom_call.1} parent=5 // pred_check
        %p344 = pneg %p343
      $region46: #{tpu_custom_call.1} parent=5 // pred_check_branch
        %346 = sbr.rel (%p344) target = $region48
      $region47: #{tpu_custom_call.1} parent=5 // pred_region
        // Predicated region
        $region49: #{tpu_custom_call.1} parent=47 // pred_check
          %p347 = pneg %p42
        $region50: #{tpu_custom_call.1} parent=47 // pred_check_branch
          %349 = sbr.rel (%p347) target = $region52
        $region51: #{tpu_custom_call.1} parent=47 // pred_region
          %p350 = scmp.lt.s32.totalorder %s22, 3
          %s351 = scalar_select %p350, %s22, 3
          %s352 = smul.addr %s351, 16
          %s353 = smul.addr %s352, 4
          %s354 = scalar_lea.vmem %s0, %s353
        $region52: #{tpu_custom_call.1} parent=47 // pred_fallthru
          _
        // Predicated region
        $region53: #{tpu_custom_call.1} parent=47 // pred_check
          %p355 = pneg %p68
        $region54: #{tpu_custom_call.1} parent=47 // pred_check_branch
          %357 = sbr.rel (%p355) target = $region56
        $region55: #{tpu_custom_call.1} parent=47 // pred_region
          %p358 = scmp.lt.s32.totalorder %s22, 3
          %s359 = scalar_select %p358, %s22, 3
          %s360 = smul.addr %s359, 16
          %s361 = smul.addr %s360, 4
          %s362 = scalar_lea.vmem %s1, %s361
        $region56: #{tpu_custom_call.1} parent=47 // pred_fallthru
          _
        // Predicated region
        $region57: #{tpu_custom_call.1} parent=47 // pred_check
          %p363 = pneg %p220
        $region58: #{tpu_custom_call.1} parent=47 // pred_check_branch
          %365 = sbr.rel (%p363) target = $region60
        $region59: #{tpu_custom_call.1} parent=47 // pred_region
          %p366 = scmp.lt.s32.totalorder %s22, 3
          %s367 = scalar_select %p366, %s22, 3
          %s368 = smul.addr %s367, 2
          %s369 = smul.addr %s368, 4
          %s370 = scalar_lea.vmem %s8, %s369
        $region60: #{tpu_custom_call.1} parent=47 // pred_fallthru
          _
      $region48: #{tpu_custom_call.1} parent=5 // pred_fallthru
        _
      %p371 = scmp.le.s32.totalorder 1, %s22
      %p372 = scmp.lt.s32.totalorder %s22, 5
      %p373 = pnand %p371, %p372
      %p374 = pneg %p373
      // Predicated region
      $region61: #{tpu_custom_call.1} parent=5 // pred_check
        _
      $region62: #{tpu_custom_call.1} parent=5 // pred_check_branch
        %376 = sbr.rel (%p373) target = $region64
      $region63: #{tpu_custom_call.1} parent=5 // pred_region
        %s377 = ssub.s32 %s22, 1
        // Predicated region
        $region65: #{tpu_custom_call.1} parent=63 // pred_check
          %p378 = pneg %p95
        $region66: #{tpu_custom_call.1} parent=63 // pred_check_branch
          %380 = sbr.rel (%p378) target = $region68
        $region67: #{tpu_custom_call.1} parent=63 // pred_region
          %381 = dma.done [#allocation4], 128
        $region68: #{tpu_custom_call.1} parent=63 // pred_fallthru
          _
        %p382 = scmp.lt.s32.totalorder %s27, 3
        %s383 = scalar_select %p382, %s27, 3
        %s384 = smul.addr %s383, 16
        %s385 = smul.addr %s384, 4
        %s386 = scalar_lea.vmem %s0, %s385
        %p387 = pneg %p48
        %p388 = pneg %p45
        %p389 = scmp.lt.s32.totalorder %s27, 3
        %s390 = scalar_select %p389, %s27, 3
        %s391 = smul.addr %s390, 16
        %s392 = smul.addr %s391, 4
        %s393 = scalar_lea.vmem %s1, %s392
        %p394 = pneg %p74
        %p395 = pneg %p71
        %p396 = pneg %p95
        %p397 = pneg %p92
        %p398 = pneg %p116
        %p399 = pneg %p113
        %p400 = pneg %p137
        %p401 = pneg %p134
        %p402 = pneg %p158
        %p403 = pneg %p155
        %p404 = pneg %p179
        %p405 = pneg %p176
        %p406 = pneg %p200
        %p407 = pneg %p197
        %p408 = scmp.lt.s32.totalorder %s27, 3
        %s409 = scalar_select %p408, %s27, 3
        %s410 = smul.addr %s409, 2
        %s411 = smul.addr %s410, 4
        %s412 = scalar_lea.vmem %s8, %s411
        %p413 = pneg %p226
        %p414 = pneg %p223
        %p415 = pneg %p247
        %p416 = pneg %p244
        %p417 = pneg %p268
        %p418 = pneg %p265
        %p419 = pneg %p294
        %p420 = pneg %p291
        %s421 = sand.u32 %s281, 1
        %s422 = scalar_lea.sflag [#allocation5], %s421
        %s423 = sand.u32 %s281, 1
        %s424 = smul.addr %s423, 16
        %s425 = scalar_lea.vmem [#allocation6], %s424
        %p426 = scmp.lt.s32.totalorder %s27, 3
        %s427 = scalar_select %p426, %s27, 3
        %s428 = smul.addr %s427, 16
        %s429 = smul.addr %s428, 4
        %s430 = scalar_lea.vmem %s0, %s429
        %p431 = scmp.lt.s32.totalorder %s27, 3
        %s432 = scalar_select %p431, %s27, 3
        %s433 = smul.addr %s432, 16
        %s434 = smul.addr %s433, 4
        %s435 = scalar_lea.vmem %s1, %s434
        %p436 = scmp.lt.s32.totalorder %s27, 3
        %s437 = scalar_select %p436, %s27, 3
        %s438 = smul.addr %s437, 2
        %s439 = smul.addr %s438, 4
        %s440 = scalar_lea.vmem %s8, %s439
        %s441 = smul.u32 2, %s27
        %v443 = vld [vmem:[%s430] sm:$0xf]
        %v444 = vld [vmem:[%s430 + $0x4] sm:$0xf]
        %v445 = vld [vmem:[%s430 + $0x8] sm:$0xf]
        %v446 = vld [vmem:[%s430 + $0xc] sm:$0xf]
        %v447 = vld [vmem:[%s430 + $0x10] sm:$0xf]
        %v448 = vld [vmem:[%s430 + $0x14] sm:$0xf]
        %v449 = vld [vmem:[%s430 + $0x18] sm:$0xf]
        %v450 = vld [vmem:[%s430 + $0x1c] sm:$0xf]
        %v451 = vld [vmem:[%s430 + $0x20] sm:$0xf]
        %v452 = vld [vmem:[%s430 + $0x24] sm:$0xf]
        %v453 = vld [vmem:[%s430 + $0x28] sm:$0xf]
        %v454 = vld [vmem:[%s430 + $0x2c] sm:$0xf]
        %v455 = vld [vmem:[%s430 + $0x30] sm:$0xf]
        %v456 = vld [vmem:[%s430 + $0x34] sm:$0xf]
        %v457 = vld [vmem:[%s430 + $0x38] sm:$0xf]
        %v458 = vld [vmem:[%s430 + $0x3c] sm:$0xf]
        %v459 = vld [vmem:[%s435] sm:$0xf]
        %v460 = vld [vmem:[%s435 + $0x4] sm:$0xf]
        %v461 = vld [vmem:[%s435 + $0x8] sm:$0xf]
        %v462 = vld [vmem:[%s435 + $0xc] sm:$0xf]
        %v463 = vld [vmem:[%s435 + $0x10] sm:$0xf]
        %v464 = vld [vmem:[%s435 + $0x14] sm:$0xf]
        %v465 = vld [vmem:[%s435 + $0x18] sm:$0xf]
        %v466 = vld [vmem:[%s435 + $0x1c] sm:$0xf]
        %v467 = vld [vmem:[%s435 + $0x20] sm:$0xf]
        %v468 = vld [vmem:[%s435 + $0x24] sm:$0xf]
        %v469 = vld [vmem:[%s435 + $0x28] sm:$0xf]
        %v470 = vld [vmem:[%s435 + $0x2c] sm:$0xf]
        %v471 = vld [vmem:[%s435 + $0x30] sm:$0xf]
        %v472 = vld [vmem:[%s435 + $0x34] sm:$0xf]
        %v473 = vld [vmem:[%s435 + $0x38] sm:$0xf]
        %v474 = vld [vmem:[%s435 + $0x3c] sm:$0xf]
        %v491 = vunpack.c.l.b16 %v443
        %v492 = vunpack.c.l.b16 %v444
        %v493 = vunpack.c.l.b16 %v445
        %v494 = vunpack.c.l.b16 %v446
        %v495 = vunpack.c.l.b16 %v447
        %v496 = vunpack.c.l.b16 %v448
        %v497 = vunpack.c.l.b16 %v449
        %v498 = vunpack.c.l.b16 %v450
        %v499 = vunpack.c.l.b16 %v451
        %v500 = vunpack.c.l.b16 %v452
        %v501 = vunpack.c.l.b16 %v453
        %v502 = vunpack.c.l.b16 %v454
        %v503 = vunpack.c.l.b16 %v455
        %v504 = vunpack.c.l.b16 %v456
        %v505 = vunpack.c.l.b16 %v457
        %v506 = vunpack.c.l.b16 %v458
        %v507 = vpack.c.b16 %v492, %v491
        %v508 = vpack.c.b16 %v494, %v493
        %v509 = vpack.c.b16 %v496, %v495
        %v510 = vpack.c.b16 %v498, %v497
        %v511 = vpack.c.b16 %v500, %v499
        %v512 = vpack.c.b16 %v502, %v501
        %v513 = vpack.c.b16 %v504, %v503
        %v514 = vpack.c.b16 %v506, %v505
        %v539 = vunpack.c.l.b16 %v459
        %v540 = vunpack.c.l.b16 %v460
        %v541 = vunpack.c.l.b16 %v461
        %v542 = vunpack.c.l.b16 %v462
        %v543 = vunpack.c.l.b16 %v463
        %v544 = vunpack.c.l.b16 %v464
        %v545 = vunpack.c.l.b16 %v465
        %v546 = vunpack.c.l.b16 %v466
        %v547 = vunpack.c.l.b16 %v467
        %v548 = vunpack.c.l.b16 %v468
        %v549 = vunpack.c.l.b16 %v469
        %v550 = vunpack.c.l.b16 %v470
        %v551 = vunpack.c.l.b16 %v471
        %v552 = vunpack.c.l.b16 %v472
        %v553 = vunpack.c.l.b16 %v473
        %v554 = vunpack.c.l.b16 %v474
        %v555 = vpack.c.b16 %v540, %v539
        %v556 = vpack.c.b16 %v542, %v541
        %v557 = vpack.c.b16 %v544, %v543
        %v558 = vpack.c.b16 %v546, %v545
        %v559 = vpack.c.b16 %v548, %v547
        %v560 = vpack.c.b16 %v550, %v549
        %v561 = vpack.c.b16 %v552, %v551
        %v562 = vpack.c.b16 %v554, %v553
        %571 = vmatprep.subr.bf16.mxu0 0
        %572 = vmatpush1.bf16.msra.mxu0 %v555
        %573 = vmatprep.subr.bf16.mxu0 0
        %574 = vmatpush1.bf16.msra.mxu0 %v556
        %575 = vmatprep.subr.bf16.mxu0 0
        %576 = vmatpush1.bf16.msra.mxu0 %v557
        %577 = vmatprep.subr.bf16.mxu0 0
        %578 = vmatpush1.bf16.msra.mxu0 %v558
        %579 = vmatprep.subr.bf16.mxu0 0
        %580 = vmatpush1.bf16.msra.mxu0 %v559
        %581 = vmatprep.subr.bf16.mxu0 0
        %582 = vmatpush1.bf16.msra.mxu0 %v560
        %583 = vmatprep.subr.bf16.mxu0 0
        %584 = vmatpush1.bf16.msra.mxu0 %v561
        %585 = vmatprep.subr.bf16.mxu0 0
        %586 = vmatpush1.bf16.msra.mxu0 %v562
        %587 = vmatprep.subr.bf16.mxu0 0
        %588 = vmatpush1.bf16.msra.mxu0 0
        %589 = vmatprep.subr.bf16.mxu0 0
        %590 = vmatpush1.bf16.msra.mxu0 0
        %591 = vmatprep.subr.bf16.mxu0 0
        %592 = vmatpush1.bf16.msra.mxu0 0
        %593 = vmatprep.subr.bf16.mxu0 0
        %594 = vmatpush1.bf16.msra.mxu0 0
        %595 = vmatprep.subr.bf16.mxu0 0
        %596 = vmatpush1.bf16.msra.mxu0 0
        %597 = vmatprep.subr.bf16.mxu0 0
        %598 = vmatpush1.bf16.msra.mxu0 0
        %599 = vmatprep.subr.bf16.mxu0 0
        %600 = vmatpush1.bf16.msra.mxu0 0
        %601 = vmatprep.subr.bf16.mxu0 0
        %602 = vmatpush1.bf16.msra.mxu0 0
        %603 = vmatprep.mubr.bf16.mxu0 0
        %604 = vmatmul.mubr.bf16.gmra.mrb[0].mxu0 %v507
        %v605 = vpop.f32.mrb[0].mxu0
        %v606 = vadd.f32 0.0, %v605
        %v607 = vpop.f32.mrb[0].mxu0
        %v608 = vpop.f32.mrb[0].mxu0
        %v609 = vadd.f32 0.0, %v608
        %v610 = vpop.f32.mrb[0].mxu0
        %611 = vmatprep.mubr.bf16.mxu0 0
        %612 = vmatmul.mubr.bf16.gmra.mrb[0].mxu0 %v508
        %v613 = vpop.f32.mrb[0].mxu0
        %v614 = vadd.f32 0.0, %v613
        %v615 = vpop.f32.mrb[0].mxu0
        %v616 = vpop.f32.mrb[0].mxu0
        %v617 = vadd.f32 0.0, %v616
        %v618 = vpop.f32.mrb[0].mxu0
        %619 = vmatprep.mubr.bf16.mxu0 0
        %620 = vmatmul.mubr.bf16.gmra.mrb[0].mxu0 %v509
        %v621 = vpop.f32.mrb[0].mxu0
        %v622 = vadd.f32 0.0, %v621
        %v623 = vpop.f32.mrb[0].mxu0
        %v624 = vpop.f32.mrb[0].mxu0
        %v625 = vadd.f32 0.0, %v624
        %v626 = vpop.f32.mrb[0].mxu0
        %627 = vmatprep.mubr.bf16.mxu0 0
        %628 = vmatmul.mubr.bf16.gmra.mrb[0].mxu0 %v510
        %v629 = vpop.f32.mrb[0].mxu0
        %v630 = vadd.f32 0.0, %v629
        %v631 = vpop.f32.mrb[0].mxu0
        %v632 = vpop.f32.mrb[0].mxu0
        %v633 = vadd.f32 0.0, %v632
        %v634 = vpop.f32.mrb[0].mxu0
        %635 = vmatprep.mubr.bf16.mxu0 0
        %636 = vmatmul.mubr.bf16.gmra.mrb[0].mxu0 %v511
        %v637 = vpop.f32.mrb[0].mxu0
        %v638 = vadd.f32 0.0, %v637
        %v639 = vpop.f32.mrb[0].mxu0
        %v640 = vpop.f32.mrb[0].mxu0
        %v641 = vadd.f32 0.0, %v640
        %v642 = vpop.f32.mrb[0].mxu0
        %643 = vmatprep.mubr.bf16.mxu0 0
        %644 = vmatmul.mubr.bf16.gmra.mrb[0].mxu0 %v512
        %v645 = vpop.f32.mrb[0].mxu0
        %v646 = vadd.f32 0.0, %v645
        %v647 = vpop.f32.mrb[0].mxu0
        %v648 = vpop.f32.mrb[0].mxu0
        %v649 = vadd.f32 0.0, %v648
        %v650 = vpop.f32.mrb[0].mxu0
        %651 = vmatprep.mubr.bf16.mxu0 0
        %652 = vmatmul.mubr.bf16.gmra.mrb[0].mxu0 %v513
        %v653 = vpop.f32.mrb[0].mxu0
        %v654 = vadd.f32 0.0, %v653
        %v655 = vpop.f32.mrb[0].mxu0
        %v656 = vpop.f32.mrb[0].mxu0
        %v657 = vadd.f32 0.0, %v656
        %v658 = vpop.f32.mrb[0].mxu0
        %659 = vmatprep.mubr.bf16.mxu0 0
        %660 = vmatmul.mubr.bf16.gmra.mrb[0].mxu0 %v514
        %v661 = vpop.f32.mrb[0].mxu0
        %v662 = vadd.f32 0.0, %v661
        %v663 = vpop.f32.mrb[0].mxu0
        %v664 = vpop.f32.mrb[0].mxu0
        %v665 = vadd.f32 0.0, %v664
        %v666 = vpop.f32.mrb[0].mxu0
        %667 = vdwg.mxu0
        %v668 = vpack.c.bf16 %v609, %v606
        %v669 = vpack.c.bf16 %v617, %v614
        %v670 = vpack.c.bf16 %v625, %v622
        %v671 = vpack.c.bf16 %v633, %v630
        %v672 = vpack.c.bf16 %v641, %v638
        %v673 = vpack.c.bf16 %v649, %v646
        %v674 = vpack.c.bf16 %v657, %v654
        %v675 = vpack.c.bf16 %v665, %v662
        %v676 = vld [vmem:[#allocation3] sm:$0xf]
        %v677 = vld [vmem:[#allocation3 + $0x4] sm:$0xf]
        %v678 = vld [vmem:[%s3] sm:$0x1]
        %v680 = vlaneseq
        %v681 = vshrl.u32 %v680, 7
        %v682 = vsub.s32 0, %v681
        %v683 = vrot.slane %v678, %v682
        %v687 = vunpack.c.l.b16 %v676
        %v688 = vunpack.c.l.b16 %v677
        %v689 = vpack.c.b16 %v688, %v687
        %vm691 = vcmask 130048
        %v693 = vsel %vm691, %v668, 0
        %v696 = vsel %vm691, %v669, 0
        %v699 = vsel %vm691, %v670, 0
        %v702 = vsel %vm691, %v671, 0
        %v705 = vsel %vm691, %v672, 0
        %v708 = vsel %vm691, %v673, 0
        %v711 = vsel %vm691, %v674, 0
        %v714 = vsel %vm691, %v675, 0
        %716 = vmatprep.subr.bf16.mxu0 0
        %717 = vmatpush1.bf16.msra.mxu0 %v689
        %718 = vmatprep.subr.bf16.mxu0 0
        %719 = vmatpush1.bf16.msra.mxu0 0
        %720 = vmatprep.subr.bf16.mxu0 0
        %721 = vmatpush1.bf16.msra.mxu0 0
        %722 = vmatprep.subr.bf16.mxu0 0
        %723 = vmatpush1.bf16.msra.mxu0 0
        %724 = vmatprep.subr.bf16.mxu0 0
        %725 = vmatpush1.bf16.msra.mxu0 0
        %726 = vmatprep.subr.bf16.mxu0 0
        %727 = vmatpush1.bf16.msra.mxu0 0
        %728 = vmatprep.subr.bf16.mxu0 0
        %729 = vmatpush1.bf16.msra.mxu0 0
        %730 = vmatprep.subr.bf16.mxu0 0
        %731 = vmatpush1.bf16.msra.mxu0 0
        %732 = vmatprep.subr.bf16.mxu0 0
        %733 = vmatpush1.bf16.msra.mxu0 0
        %734 = vmatprep.subr.bf16.mxu0 0
        %735 = vmatpush1.bf16.msra.mxu0 0
        %736 = vmatprep.subr.bf16.mxu0 0
        %737 = vmatpush1.bf16.msra.mxu0 0
        %738 = vmatprep.subr.bf16.mxu0 0
        %739 = vmatpush1.bf16.msra.mxu0 0
        %740 = vmatprep.subr.bf16.mxu0 0
        %741 = vmatpush1.bf16.msra.mxu0 0
        %742 = vmatprep.subr.bf16.mxu0 0
        %743 = vmatpush1.bf16.msra.mxu0 0
        %744 = vmatprep.subr.bf16.mxu0 0
        %745 = vmatpush1.bf16.msra.mxu0 0
        %746 = vmatprep.subr.bf16.mxu0 0
        %747 = vmatpush1.bf16.msra.mxu0 0
        %748 = vmatprep.mubr.bf16.mxu0 0
        %749 = vmatmul.mubr.bf16.gmra.mrb[0].mxu0 %v693
        %v750 = vpop.f32.mrb[0].mxu0
        %v751 = vadd.f32 %v683, %v750
        %v752 = vpop.f32.mrb[0].mxu0
        %v753 = vpop.f32.mrb[0].mxu0
        %v754 = vadd.f32 %v683, %v753
        %v755 = vpop.f32.mrb[0].mxu0
        %756 = vmatprep.mubr.bf16.mxu0 0
        %757 = vmatmul.mubr.bf16.gmra.mrb[0].mxu0 %v696
        %v758 = vpop.f32.mrb[0].mxu0
        %v759 = vadd.f32 %v683, %v758
        %v760 = vpop.f32.mrb[0].mxu0
        %v761 = vpop.f32.mrb[0].mxu0
        %v762 = vadd.f32 %v683, %v761
        %v763 = vpop.f32.mrb[0].mxu0
        %764 = vmatprep.mubr.bf16.mxu0 0
        %765 = vmatmul.mubr.bf16.gmra.mrb[0].mxu0 %v699
        %v766 = vpop.f32.mrb[0].mxu0
        %v767 = vadd.f32 %v683, %v766
        %v768 = vpop.f32.mrb[0].mxu0
        %v769 = vpop.f32.mrb[0].mxu0
        %v770 = vadd.f32 %v683, %v769
        %v771 = vpop.f32.mrb[0].mxu0
        %772 = vmatprep.mubr.bf16.mxu0 0
        %773 = vmatmul.mubr.bf16.gmra.mrb[0].mxu0 %v702
        %v774 = vpop.f32.mrb[0].mxu0
        %v775 = vadd.f32 %v683, %v774
        %v776 = vpop.f32.mrb[0].mxu0
        %v777 = vpop.f32.mrb[0].mxu0
        %v778 = vadd.f32 %v683, %v777
        %v779 = vpop.f32.mrb[0].mxu0
        %780 = vmatprep.mubr.bf16.mxu0 0
        %781 = vmatmul.mubr.bf16.gmra.mrb[0].mxu0 %v705
        %v782 = vpop.f32.mrb[0].mxu0
        %v783 = vadd.f32 %v683, %v782
        %v784 = vpop.f32.mrb[0].mxu0
        %v785 = vpop.f32.mrb[0].mxu0
        %v786 = vadd.f32 %v683, %v785
        %v787 = vpop.f32.mrb[0].mxu0
        %788 = vmatprep.mubr.bf16.mxu0 0
        %789 = vmatmul.mubr.bf16.gmra.mrb[0].mxu0 %v708
        %v790 = vpop.f32.mrb[0].mxu0
        %v791 = vadd.f32 %v683, %v790
        %v792 = vpop.f32.mrb[0].mxu0
        %v793 = vpop.f32.mrb[0].mxu0
        %v794 = vadd.f32 %v683, %v793
        %v795 = vpop.f32.mrb[0].mxu0
        %796 = vmatprep.mubr.bf16.mxu0 0
        %797 = vmatmul.mubr.bf16.gmra.mrb[0].mxu0 %v711
        %v798 = vpop.f32.mrb[0].mxu0
        %v799 = vadd.f32 %v683, %v798
        %v800 = vpop.f32.mrb[0].mxu0
        %v801 = vpop.f32.mrb[0].mxu0
        %v802 = vadd.f32 %v683, %v801
        %v803 = vpop.f32.mrb[0].mxu0
        %804 = vmatprep.mubr.bf16.mxu0 0
        %805 = vmatmul.mubr.bf16.gmra.mrb[0].mxu0 %v714
        %v806 = vpop.f32.mrb[0].mxu0
        %v807 = vadd.f32 %v683, %v806
        %v808 = vpop.f32.mrb[0].mxu0
        %v809 = vpop.f32.mrb[0].mxu0
        %v810 = vadd.f32 %v683, %v809
        %v811 = vpop.f32.mrb[0].mxu0
        %812 = vdwg.mxu0
        %v813 = vmax.f32 %v751, 0.0
        %v814 = vmax.f32 %v754, 0.0
        %v815 = vmax.f32 %v759, 0.0
        %v816 = vmax.f32 %v762, 0.0
        %v817 = vmax.f32 %v767, 0.0
        %v818 = vmax.f32 %v770, 0.0
        %v819 = vmax.f32 %v775, 0.0
        %v820 = vmax.f32 %v778, 0.0
        %v821 = vmax.f32 %v783, 0.0
        %v822 = vmax.f32 %v786, 0.0
        %v823 = vmax.f32 %v791, 0.0
        %v824 = vmax.f32 %v794, 0.0
        %v825 = vmax.f32 %v799, 0.0
        %v826 = vmax.f32 %v802, 0.0
        %v827 = vmax.f32 %v807, 0.0
        %v828 = vmax.f32 %v810, 0.0
        %v829 = vpack.c.bf16 %v814, %v813
        %v830 = vpack.c.bf16 %v816, %v815
        %v831 = vpack.c.bf16 %v818, %v817
        %v832 = vpack.c.bf16 %v820, %v819
        %v833 = vpack.c.bf16 %v822, %v821
        %v834 = vpack.c.bf16 %v824, %v823
        %v835 = vpack.c.bf16 %v826, %v825
        %v836 = vpack.c.bf16 %v828, %v827
        %v837 = vld [vmem:[%s4] sm:$0xf]
        %v838 = vld [vmem:[%s4 + $0x4] sm:$0xf]
        %v839 = vld [vmem:[%s4 + $0x8] sm:$0xf]
        %v840 = vld [vmem:[%s4 + $0xc] sm:$0xf]
        %v841 = vld [vmem:[%s4 + $0x10] sm:$0xf]
        %v842 = vld [vmem:[%s4 + $0x14] sm:$0xf]
        %v843 = vld [vmem:[%s4 + $0x18] sm:$0xf]
        %v844 = vld [vmem:[%s4 + $0x1c] sm:$0xf]
        %v845 = vld [vmem:[%s4 + $0x20] sm:$0xf]
        %v846 = vld [vmem:[%s4 + $0x24] sm:$0xf]
        %v847 = vld [vmem:[%s4 + $0x28] sm:$0xf]
        %v848 = vld [vmem:[%s4 + $0x2c] sm:$0xf]
        %v849 = vld [vmem:[%s4 + $0x30] sm:$0xf]
        %v850 = vld [vmem:[%s4 + $0x34] sm:$0xf]
        %v851 = vld [vmem:[%s4 + $0x38] sm:$0xf]
        %v852 = vld [vmem:[%s4 + $0x3c] sm:$0xf]
        %v869 = vunpack.c.l.b16 %v837
        %v870 = vunpack.c.l.b16 %v838
        %v871 = vunpack.c.l.b16 %v839
        %v872 = vunpack.c.l.b16 %v840
        %v873 = vunpack.c.l.b16 %v841
        %v874 = vunpack.c.l.b16 %v842
        %v875 = vunpack.c.l.b16 %v843
        %v876 = vunpack.c.l.b16 %v844
        %v877 = vunpack.c.l.b16 %v845
        %v878 = vunpack.c.l.b16 %v846
        %v879 = vunpack.c.l.b16 %v847
        %v880 = vunpack.c.l.b16 %v848
        %v881 = vunpack.c.l.b16 %v849
        %v882 = vunpack.c.l.b16 %v850
        %v883 = vunpack.c.l.b16 %v851
        %v884 = vunpack.c.l.b16 %v852
        %v885 = vpack.c.b16 %v870, %v869
        %v886 = vpack.c.b16 %v872, %v871
        %v887 = vpack.c.b16 %v874, %v873
        %v888 = vpack.c.b16 %v876, %v875
        %v889 = vpack.c.b16 %v878, %v877
        %v890 = vpack.c.b16 %v880, %v879
        %v891 = vpack.c.b16 %v882, %v881
        %v892 = vpack.c.b16 %v884, %v883
        %901 = vmatprep.subr.bf16.mxu0 0
        %902 = vmatpush1.bf16.msra.mxu0 %v885
        %903 = vmatprep.subr.bf16.mxu0 0
        %904 = vmatpush1.bf16.msra.mxu0 %v886
        %905 = vmatprep.subr.bf16.mxu0 0
        %906 = vmatpush1.bf16.msra.mxu0 %v887
        %907 = vmatprep.subr.bf16.mxu0 0
        %908 = vmatpush1.bf16.msra.mxu0 %v888
        %909 = vmatprep.subr.bf16.mxu0 0
        %910 = vmatpush1.bf16.msra.mxu0 %v889
        %911 = vmatprep.subr.bf16.mxu0 0
        %912 = vmatpush1.bf16.msra.mxu0 %v890
        %913 = vmatprep.subr.bf16.mxu0 0
        %914 = vmatpush1.bf16.msra.mxu0 %v891
        %915 = vmatprep.subr.bf16.mxu0 0
        %916 = vmatpush1.bf16.msra.mxu0 %v892
        %917 = vmatprep.subr.bf16.mxu0 0
        %918 = vmatpush1.bf16.msra.mxu0 0
        %919 = vmatprep.subr.bf16.mxu0 0
        %920 = vmatpush1.bf16.msra.mxu0 0
        %921 = vmatprep.subr.bf16.mxu0 0
        %922 = vmatpush1.bf16.msra.mxu0 0
        %923 = vmatprep.subr.bf16.mxu0 0
        %924 = vmatpush1.bf16.msra.mxu0 0
        %925 = vmatprep.subr.bf16.mxu0 0
        %926 = vmatpush1.bf16.msra.mxu0 0
        %927 = vmatprep.subr.bf16.mxu0 0
        %928 = vmatpush1.bf16.msra.mxu0 0
        %929 = vmatprep.subr.bf16.mxu0 0
        %930 = vmatpush1.bf16.msra.mxu0 0
        %931 = vmatprep.subr.bf16.mxu0 0
        %932 = vmatpush1.bf16.msra.mxu0 0
        %933 = vmatprep.mubr.bf16.mxu0 0
        %934 = vmatmul.mubr.bf16.gmra.mrb[0].mxu0 %v829
        %v935 = vpop.f32.mrb[0].mxu0
        %v936 = vadd.f32 0.0, %v935
        %v937 = vpop.f32.mrb[0].mxu0
        %v938 = vpop.f32.mrb[0].mxu0
        %v939 = vadd.f32 0.0, %v938
        %v940 = vpop.f32.mrb[0].mxu0
        %941 = vmatprep.mubr.bf16.mxu0 0
        %942 = vmatmul.mubr.bf16.gmra.mrb[0].mxu0 %v830
        %v943 = vpop.f32.mrb[0].mxu0
        %v944 = vadd.f32 0.0, %v943
        %v945 = vpop.f32.mrb[0].mxu0
        %v946 = vpop.f32.mrb[0].mxu0
        %v947 = vadd.f32 0.0, %v946
        %v948 = vpop.f32.mrb[0].mxu0
        %949 = vmatprep.mubr.bf16.mxu0 0
        %950 = vmatmul.mubr.bf16.gmra.mrb[0].mxu0 %v831
        %v951 = vpop.f32.mrb[0].mxu0
        %v952 = vadd.f32 0.0, %v951
        %v953 = vpop.f32.mrb[0].mxu0
        %v954 = vpop.f32.mrb[0].mxu0
        %v955 = vadd.f32 0.0, %v954
        %v956 = vpop.f32.mrb[0].mxu0
        %957 = vmatprep.mubr.bf16.mxu0 0
        %958 = vmatmul.mubr.bf16.gmra.mrb[0].mxu0 %v832
        %v959 = vpop.f32.mrb[0].mxu0
        %v960 = vadd.f32 0.0, %v959
        %v961 = vpop.f32.mrb[0].mxu0
        %v962 = vpop.f32.mrb[0].mxu0
        %v963 = vadd.f32 0.0, %v962
        %v964 = vpop.f32.mrb[0].mxu0
        %965 = vmatprep.mubr.bf16.mxu0 0
        %966 = vmatmul.mubr.bf16.gmra.mrb[0].mxu0 %v833
        %v967 = vpop.f32.mrb[0].mxu0
        %v968 = vadd.f32 0.0, %v967
        %v969 = vpop.f32.mrb[0].mxu0
        %v970 = vpop.f32.mrb[0].mxu0
        %v971 = vadd.f32 0.0, %v970
        %v972 = vpop.f32.mrb[0].mxu0
        %973 = vmatprep.mubr.bf16.mxu0 0
        %974 = vmatmul.mubr.bf16.gmra.mrb[0].mxu0 %v834
        %v975 = vpop.f32.mrb[0].mxu0
        %v976 = vadd.f32 0.0, %v975
        %v977 = vpop.f32.mrb[0].mxu0
        %v978 = vpop.f32.mrb[0].mxu0
        %v979 = vadd.f32 0.0, %v978
        %v980 = vpop.f32.mrb[0].mxu0
        %981 = vmatprep.mubr.bf16.mxu0 0
        %982 = vmatmul.mubr.bf16.gmra.mrb[0].mxu0 %v835
        %v983 = vpop.f32.mrb[0].mxu0
        %v984 = vadd.f32 0.0, %v983
        %v985 = vpop.f32.mrb[0].mxu0
        %v986 = vpop.f32.mrb[0].mxu0
        %v987 = vadd.f32 0.0, %v986
        %v988 = vpop.f32.mrb[0].mxu0
        %989 = vmatprep.mubr.bf16.mxu0 0
        %990 = vmatmul.mubr.bf16.gmra.mrb[0].mxu0 %v836
        %v991 = vpop.f32.mrb[0].mxu0
        %v992 = vadd.f32 0.0, %v991
        %v993 = vpop.f32.mrb[0].mxu0
        %v994 = vpop.f32.mrb[0].mxu0
        %v995 = vadd.f32 0.0, %v994
        %v996 = vpop.f32.mrb[0].mxu0
        %997 = vdwg.mxu0
        %v998 = vpack.c.bf16 %v939, %v936
        %v999 = vpack.c.bf16 %v947, %v944
        %v1000 = vpack.c.bf16 %v955, %v952
        %v1001 = vpack.c.bf16 %v963, %v960
        %v1002 = vpack.c.bf16 %v971, %v968
        %v1003 = vpack.c.bf16 %v979, %v976
        %v1004 = vpack.c.bf16 %v987, %v984
        %v1005 = vpack.c.bf16 %v995, %v992
        %v1006 = vld [vmem:[%s5] sm:$0x1]
        %v1008 = vlaneseq
        %v1009 = vshrl.u32 %v1008, 7
        %v1010 = vsub.s32 0, %v1009
        %v1011 = vrot.slane %v1006, %v1010
        %1013 = vmatprep.subr.bf16.mxu0 0
        %1014 = vmatpush1.bf16.msra.mxu0 %v998
        %1015 = vmatprep.subr.bf16.mxu0 0
        %1016 = vmatpush1.bf16.msra.mxu0 %v999
        %1017 = vmatprep.subr.bf16.mxu0 0
        %1018 = vmatpush1.bf16.msra.mxu0 %v1000
        %1019 = vmatprep.subr.bf16.mxu0 0
        %1020 = vmatpush1.bf16.msra.mxu0 %v1001
        %1021 = vmatprep.subr.bf16.mxu0 0
        %1022 = vmatpush1.bf16.msra.mxu0 %v1002
        %1023 = vmatprep.subr.bf16.mxu0 0
        %1024 = vmatpush1.bf16.msra.mxu0 %v1003
        %1025 = vmatprep.subr.bf16.mxu0 0
        %1026 = vmatpush1.bf16.msra.mxu0 %v1004
        %1027 = vmatprep.subr.bf16.mxu0 0
        %1028 = vmatpush1.bf16.msra.mxu0 %v1005
        %1029 = vmatprep.subr.bf16.mxu0 0
        %1030 = vmatpush1.bf16.msra.mxu0 0
        %1031 = vmatprep.subr.bf16.mxu0 0
        %1032 = vmatpush1.bf16.msra.mxu0 0
        %1033 = vmatprep.subr.bf16.mxu0 0
        %1034 = vmatpush1.bf16.msra.mxu0 0
        %1035 = vmatprep.subr.bf16.mxu0 0
        %1036 = vmatpush1.bf16.msra.mxu0 0
        %1037 = vmatprep.subr.bf16.mxu0 0
        %1038 = vmatpush1.bf16.msra.mxu0 0
        %1039 = vmatprep.subr.bf16.mxu0 0
        %1040 = vmatpush1.bf16.msra.mxu0 0
        %1041 = vmatprep.subr.bf16.mxu0 0
        %1042 = vmatpush1.bf16.msra.mxu0 0
        %1043 = vmatprep.subr.bf16.mxu0 0
        %1044 = vmatpush1.bf16.msra.mxu0 0
        %1045 = vmatprep.mubr.bf16.mxu0 0
        %1046 = vmatmul.mubr.bf16.gmra.mrb[0].mxu0 %v507
        %v1047 = vpop.f32.mrb[0].mxu0
        %v1048 = vadd.f32 %v1011, %v1047
        %v1049 = vpop.f32.mrb[0].mxu0
        %v1050 = vpop.f32.mrb[0].mxu0
        %v1051 = vadd.f32 %v1011, %v1050
        %v1052 = vpop.f32.mrb[0].mxu0
        %1053 = vmatprep.mubr.bf16.mxu0 0
        %1054 = vmatmul.mubr.bf16.gmra.mrb[0].mxu0 %v508
        %v1055 = vpop.f32.mrb[0].mxu0
        %v1056 = vadd.f32 %v1011, %v1055
        %v1057 = vpop.f32.mrb[0].mxu0
        %v1058 = vpop.f32.mrb[0].mxu0
        %v1059 = vadd.f32 %v1011, %v1058
        %v1060 = vpop.f32.mrb[0].mxu0
        %1061 = vmatprep.mubr.bf16.mxu0 0
        %1062 = vmatmul.mubr.bf16.gmra.mrb[0].mxu0 %v509
        %v1063 = vpop.f32.mrb[0].mxu0
        %v1064 = vadd.f32 %v1011, %v1063
        %v1065 = vpop.f32.mrb[0].mxu0
        %v1066 = vpop.f32.mrb[0].mxu0
        %v1067 = vadd.f32 %v1011, %v1066
        %v1068 = vpop.f32.mrb[0].mxu0
        %1069 = vmatprep.mubr.bf16.mxu0 0
        %1070 = vmatmul.mubr.bf16.gmra.mrb[0].mxu0 %v510
        %v1071 = vpop.f32.mrb[0].mxu0
        %v1072 = vadd.f32 %v1011, %v1071
        %v1073 = vpop.f32.mrb[0].mxu0
        %v1074 = vpop.f32.mrb[0].mxu0
        %v1075 = vadd.f32 %v1011, %v1074
        %v1076 = vpop.f32.mrb[0].mxu0
        %1077 = vmatprep.mubr.bf16.mxu0 0
        %1078 = vmatmul.mubr.bf16.gmra.mrb[0].mxu0 %v511
        %v1079 = vpop.f32.mrb[0].mxu0
        %v1080 = vadd.f32 %v1011, %v1079
        %v1081 = vpop.f32.mrb[0].mxu0
        %v1082 = vpop.f32.mrb[0].mxu0
        %v1083 = vadd.f32 %v1011, %v1082
        %v1084 = vpop.f32.mrb[0].mxu0
        %1085 = vmatprep.mubr.bf16.mxu0 0
        %1086 = vmatmul.mubr.bf16.gmra.mrb[0].mxu0 %v512
        %v1087 = vpop.f32.mrb[0].mxu0
        %v1088 = vadd.f32 %v1011, %v1087
        %v1089 = vpop.f32.mrb[0].mxu0
        %v1090 = vpop.f32.mrb[0].mxu0
        %v1091 = vadd.f32 %v1011, %v1090
        %v1092 = vpop.f32.mrb[0].mxu0
        %1093 = vmatprep.mubr.bf16.mxu0 0
        %1094 = vmatmul.mubr.bf16.gmra.mrb[0].mxu0 %v513
        %v1095 = vpop.f32.mrb[0].mxu0
        %v1096 = vadd.f32 %v1011, %v1095
        %v1097 = vpop.f32.mrb[0].mxu0
        %v1098 = vpop.f32.mrb[0].mxu0
        %v1099 = vadd.f32 %v1011, %v1098
        %v1100 = vpop.f32.mrb[0].mxu0
        %1101 = vmatprep.mubr.bf16.mxu0 0
        %1102 = vmatmul.mubr.bf16.gmra.mrb[0].mxu0 %v514
        %v1103 = vpop.f32.mrb[0].mxu0
        %v1104 = vadd.f32 %v1011, %v1103
        %v1105 = vpop.f32.mrb[0].mxu0
        %v1106 = vpop.f32.mrb[0].mxu0
        %v1107 = vadd.f32 %v1011, %v1106
        %v1108 = vpop.f32.mrb[0].mxu0
        %1109 = vdwg.mxu0
        %v1110 = vmax.f32 %v1048, 0.0
        %v1111 = vmax.f32 %v1051, 0.0
        %v1112 = vmax.f32 %v1056, 0.0
        %v1113 = vmax.f32 %v1059, 0.0
        %v1114 = vmax.f32 %v1064, 0.0
        %v1115 = vmax.f32 %v1067, 0.0
        %v1116 = vmax.f32 %v1072, 0.0
        %v1117 = vmax.f32 %v1075, 0.0
        %v1118 = vmax.f32 %v1080, 0.0
        %v1119 = vmax.f32 %v1083, 0.0
        %v1120 = vmax.f32 %v1088, 0.0
        %v1121 = vmax.f32 %v1091, 0.0
        %v1122 = vmax.f32 %v1096, 0.0
        %v1123 = vmax.f32 %v1099, 0.0
        %v1124 = vmax.f32 %v1104, 0.0
        %v1125 = vmax.f32 %v1107, 0.0
        %v1126 = vpack.c.bf16 %v1111, %v1110
        %v1127 = vpack.c.bf16 %v1113, %v1112
        %v1128 = vpack.c.bf16 %v1115, %v1114
        %v1129 = vpack.c.bf16 %v1117, %v1116
        %v1130 = vpack.c.bf16 %v1119, %v1118
        %v1131 = vpack.c.bf16 %v1121, %v1120
        %v1132 = vpack.c.bf16 %v1123, %v1122
        %v1133 = vpack.c.bf16 %v1125, %v1124
        %v1134 = vld [vmem:[%s6] sm:$0xf]
        %v1135 = vld [vmem:[%s6 + $0x4] sm:$0xf]
        %v1136 = vld [vmem:[%s6 + $0x8] sm:$0xf]
        %v1137 = vld [vmem:[%s6 + $0xc] sm:$0xf]
        %v1138 = vld [vmem:[%s6 + $0x10] sm:$0xf]
        %v1139 = vld [vmem:[%s6 + $0x14] sm:$0xf]
        %v1140 = vld [vmem:[%s6 + $0x18] sm:$0xf]
        %v1141 = vld [vmem:[%s6 + $0x1c] sm:$0xf]
        %v1142 = vld [vmem:[%s6 + $0x20] sm:$0xf]
        %v1143 = vld [vmem:[%s6 + $0x24] sm:$0xf]
        %v1144 = vld [vmem:[%s6 + $0x28] sm:$0xf]
        %v1145 = vld [vmem:[%s6 + $0x2c] sm:$0xf]
        %v1146 = vld [vmem:[%s6 + $0x30] sm:$0xf]
        %v1147 = vld [vmem:[%s6 + $0x34] sm:$0xf]
        %v1148 = vld [vmem:[%s6 + $0x38] sm:$0xf]
        %v1149 = vld [vmem:[%s6 + $0x3c] sm:$0xf]
        %v1166 = vunpack.c.l.b16 %v1134
        %v1167 = vunpack.c.l.b16 %v1135
        %v1168 = vunpack.c.l.b16 %v1136
        %v1169 = vunpack.c.l.b16 %v1137
        %v1170 = vunpack.c.l.b16 %v1138
        %v1171 = vunpack.c.l.b16 %v1139
        %v1172 = vunpack.c.l.b16 %v1140
        %v1173 = vunpack.c.l.b16 %v1141
        %v1174 = vunpack.c.l.b16 %v1142
        %v1175 = vunpack.c.l.b16 %v1143
        %v1176 = vunpack.c.l.b16 %v1144
        %v1177 = vunpack.c.l.b16 %v1145
        %v1178 = vunpack.c.l.b16 %v1146
        %v1179 = vunpack.c.l.b16 %v1147
        %v1180 = vunpack.c.l.b16 %v1148
        %v1181 = vunpack.c.l.b16 %v1149
        %v1182 = vpack.c.b16 %v1167, %v1166
        %v1183 = vpack.c.b16 %v1169, %v1168
        %v1184 = vpack.c.b16 %v1171, %v1170
        %v1185 = vpack.c.b16 %v1173, %v1172
        %v1186 = vpack.c.b16 %v1175, %v1174
        %v1187 = vpack.c.b16 %v1177, %v1176
        %v1188 = vpack.c.b16 %v1179, %v1178
        %v1189 = vpack.c.b16 %v1181, %v1180
        %1198 = vmatprep.subr.bf16.mxu0 0
        %1199 = vmatpush1.bf16.msra.mxu0 %v1182
        %1200 = vmatprep.subr.bf16.mxu0 0
        %1201 = vmatpush1.bf16.msra.mxu0 %v1183
        %1202 = vmatprep.subr.bf16.mxu0 0
        %1203 = vmatpush1.bf16.msra.mxu0 %v1184
        %1204 = vmatprep.subr.bf16.mxu0 0
        %1205 = vmatpush1.bf16.msra.mxu0 %v1185
        %1206 = vmatprep.subr.bf16.mxu0 0
        %1207 = vmatpush1.bf16.msra.mxu0 %v1186
        %1208 = vmatprep.subr.bf16.mxu0 0
        %1209 = vmatpush1.bf16.msra.mxu0 %v1187
        %1210 = vmatprep.subr.bf16.mxu0 0
        %1211 = vmatpush1.bf16.msra.mxu0 %v1188
        %1212 = vmatprep.subr.bf16.mxu0 0
        %1213 = vmatpush1.bf16.msra.mxu0 %v1189
        %1214 = vmatprep.subr.bf16.mxu0 0
        %1215 = vmatpush1.bf16.msra.mxu0 0
        %1216 = vmatprep.subr.bf16.mxu0 0
        %1217 = vmatpush1.bf16.msra.mxu0 0
        %1218 = vmatprep.subr.bf16.mxu0 0
        %1219 = vmatpush1.bf16.msra.mxu0 0
        %1220 = vmatprep.subr.bf16.mxu0 0
        %1221 = vmatpush1.bf16.msra.mxu0 0
        %1222 = vmatprep.subr.bf16.mxu0 0
        %1223 = vmatpush1.bf16.msra.mxu0 0
        %1224 = vmatprep.subr.bf16.mxu0 0
        %1225 = vmatpush1.bf16.msra.mxu0 0
        %1226 = vmatprep.subr.bf16.mxu0 0
        %1227 = vmatpush1.bf16.msra.mxu0 0
        %1228 = vmatprep.subr.bf16.mxu0 0
        %1229 = vmatpush1.bf16.msra.mxu0 0
        %1230 = vmatprep.mubr.bf16.mxu0 0
        %1231 = vmatmul.mubr.bf16.gmra.mrb[0].mxu0 %v1126
        %v1232 = vpop.f32.mrb[0].mxu0
        %v1233 = vadd.f32 0.0, %v1232
        %v1234 = vpop.f32.mrb[0].mxu0
        %v1235 = vpop.f32.mrb[0].mxu0
        %v1236 = vadd.f32 0.0, %v1235
        %v1237 = vpop.f32.mrb[0].mxu0
        %1238 = vmatprep.mubr.bf16.mxu0 0
        %1239 = vmatmul.mubr.bf16.gmra.mrb[0].mxu0 %v1127
        %v1240 = vpop.f32.mrb[0].mxu0
        %v1241 = vadd.f32 0.0, %v1240
        %v1242 = vpop.f32.mrb[0].mxu0
        %v1243 = vpop.f32.mrb[0].mxu0
        %v1244 = vadd.f32 0.0, %v1243
        %v1245 = vpop.f32.mrb[0].mxu0
        %1246 = vmatprep.mubr.bf16.mxu0 0
        %1247 = vmatmul.mubr.bf16.gmra.mrb[0].mxu0 %v1128
        %v1248 = vpop.f32.mrb[0].mxu0
        %v1249 = vadd.f32 0.0, %v1248
        %v1250 = vpop.f32.mrb[0].mxu0
        %v1251 = vpop.f32.mrb[0].mxu0
        %v1252 = vadd.f32 0.0, %v1251
        %v1253 = vpop.f32.mrb[0].mxu0
        %1254 = vmatprep.mubr.bf16.mxu0 0
        %1255 = vmatmul.mubr.bf16.gmra.mrb[0].mxu0 %v1129
        %v1256 = vpop.f32.mrb[0].mxu0
        %v1257 = vadd.f32 0.0, %v1256
        %v1258 = vpop.f32.mrb[0].mxu0
        %v1259 = vpop.f32.mrb[0].mxu0
        %v1260 = vadd.f32 0.0, %v1259
        %v1261 = vpop.f32.mrb[0].mxu0
        %1262 = vmatprep.mubr.bf16.mxu0 0
        %1263 = vmatmul.mubr.bf16.gmra.mrb[0].mxu0 %v1130
        %v1264 = vpop.f32.mrb[0].mxu0
        %v1265 = vadd.f32 0.0, %v1264
        %v1266 = vpop.f32.mrb[0].mxu0
        %v1267 = vpop.f32.mrb[0].mxu0
        %v1268 = vadd.f32 0.0, %v1267
        %v1269 = vpop.f32.mrb[0].mxu0
        %1270 = vmatprep.mubr.bf16.mxu0 0
        %1271 = vmatmul.mubr.bf16.gmra.mrb[0].mxu0 %v1131
        %v1272 = vpop.f32.mrb[0].mxu0
        %v1273 = vadd.f32 0.0, %v1272
        %v1274 = vpop.f32.mrb[0].mxu0
        %v1275 = vpop.f32.mrb[0].mxu0
        %v1276 = vadd.f32 0.0, %v1275
        %v1277 = vpop.f32.mrb[0].mxu0
        %1278 = vmatprep.mubr.bf16.mxu0 0
        %1279 = vmatmul.mubr.bf16.gmra.mrb[0].mxu0 %v1132
        %v1280 = vpop.f32.mrb[0].mxu0
        %v1281 = vadd.f32 0.0, %v1280
        %v1282 = vpop.f32.mrb[0].mxu0
        %v1283 = vpop.f32.mrb[0].mxu0
        %v1284 = vadd.f32 0.0, %v1283
        %v1285 = vpop.f32.mrb[0].mxu0
        %1286 = vmatprep.mubr.bf16.mxu0 0
        %1287 = vmatmul.mubr.bf16.gmra.mrb[0].mxu0 %v1133
        %v1288 = vpop.f32.mrb[0].mxu0
        %v1289 = vadd.f32 0.0, %v1288
        %v1290 = vpop.f32.mrb[0].mxu0
        %v1291 = vpop.f32.mrb[0].mxu0
        %v1292 = vadd.f32 0.0, %v1291
        %v1293 = vpop.f32.mrb[0].mxu0
        %1294 = vdwg.mxu0
        %v1295 = vpack.c.bf16 %v1236, %v1233
        %v1296 = vpack.c.bf16 %v1244, %v1241
        %v1297 = vpack.c.bf16 %v1252, %v1249
        %v1298 = vpack.c.bf16 %v1260, %v1257
        %v1299 = vpack.c.bf16 %v1268, %v1265
        %v1300 = vpack.c.bf16 %v1276, %v1273
        %v1301 = vpack.c.bf16 %v1284, %v1281
        %v1302 = vpack.c.bf16 %v1292, %v1289
        %v1303 = vld [vmem:[%s7] sm:$0x1]
        %v1305 = vlaneseq
        %v1306 = vshrl.u32 %v1305, 7
        %v1307 = vsub.s32 0, %v1306
        %v1308 = vrot.slane %v1303, %v1307
        %1310 = vmatprep.subr.bf16.mxu0 0
        %1311 = vmatpush1.bf16.msra.mxu0 %v1295
        %1312 = vmatprep.subr.bf16.mxu0 0
        %1313 = vmatpush1.bf16.msra.mxu0 %v1296
        %1314 = vmatprep.subr.bf16.mxu0 0
        %1315 = vmatpush1.bf16.msra.mxu0 %v1297
        %1316 = vmatprep.subr.bf16.mxu0 0
        %1317 = vmatpush1.bf16.msra.mxu0 %v1298
        %1318 = vmatprep.subr.bf16.mxu0 0
        %1319 = vmatpush1.bf16.msra.mxu0 %v1299
        %1320 = vmatprep.subr.bf16.mxu0 0
        %1321 = vmatpush1.bf16.msra.mxu0 %v1300
        %1322 = vmatprep.subr.bf16.mxu0 0
        %1323 = vmatpush1.bf16.msra.mxu0 %v1301
        %1324 = vmatprep.subr.bf16.mxu0 0
        %1325 = vmatpush1.bf16.msra.mxu0 %v1302
        %1326 = vmatprep.subr.bf16.mxu0 0
        %1327 = vmatpush1.bf16.msra.mxu0 0
        %1328 = vmatprep.subr.bf16.mxu0 0
        %1329 = vmatpush1.bf16.msra.mxu0 0
        %1330 = vmatprep.subr.bf16.mxu0 0
        %1331 = vmatpush1.bf16.msra.mxu0 0
        %1332 = vmatprep.subr.bf16.mxu0 0
        %1333 = vmatpush1.bf16.msra.mxu0 0
        %1334 = vmatprep.subr.bf16.mxu0 0
        %1335 = vmatpush1.bf16.msra.mxu0 0
        %1336 = vmatprep.subr.bf16.mxu0 0
        %1337 = vmatpush1.bf16.msra.mxu0 0
        %1338 = vmatprep.subr.bf16.mxu0 0
        %1339 = vmatpush1.bf16.msra.mxu0 0
        %1340 = vmatprep.subr.bf16.mxu0 0
        %1341 = vmatpush1.bf16.msra.mxu0 0
        %1342 = vmatprep.mubr.bf16.mxu0 0
        %1343 = vmatmul.mubr.bf16.gmra.mrb[0].mxu0 %v507
        %v1344 = vpop.f32.mrb[0].mxu0
        %v1345 = vadd.f32 %v1308, %v1344
        %v1346 = vpop.f32.mrb[0].mxu0
        %v1347 = vpop.f32.mrb[0].mxu0
        %v1348 = vadd.f32 %v1308, %v1347
        %v1349 = vpop.f32.mrb[0].mxu0
        %1350 = vmatprep.mubr.bf16.mxu0 0
        %1351 = vmatmul.mubr.bf16.gmra.mrb[0].mxu0 %v508
        %v1352 = vpop.f32.mrb[0].mxu0
        %v1353 = vadd.f32 %v1308, %v1352
        %v1354 = vpop.f32.mrb[0].mxu0
        %v1355 = vpop.f32.mrb[0].mxu0
        %v1356 = vadd.f32 %v1308, %v1355
        %v1357 = vpop.f32.mrb[0].mxu0
        %1358 = vmatprep.mubr.bf16.mxu0 0
        %1359 = vmatmul.mubr.bf16.gmra.mrb[0].mxu0 %v509
        %v1360 = vpop.f32.mrb[0].mxu0
        %v1361 = vadd.f32 %v1308, %v1360
        %v1362 = vpop.f32.mrb[0].mxu0
        %v1363 = vpop.f32.mrb[0].mxu0
        %v1364 = vadd.f32 %v1308, %v1363
        %v1365 = vpop.f32.mrb[0].mxu0
        %1366 = vmatprep.mubr.bf16.mxu0 0
        %1367 = vmatmul.mubr.bf16.gmra.mrb[0].mxu0 %v510
        %v1368 = vpop.f32.mrb[0].mxu0
        %v1369 = vadd.f32 %v1308, %v1368
        %v1370 = vpop.f32.mrb[0].mxu0
        %v1371 = vpop.f32.mrb[0].mxu0
        %v1372 = vadd.f32 %v1308, %v1371
        %v1373 = vpop.f32.mrb[0].mxu0
        %1374 = vmatprep.mubr.bf16.mxu0 0
        %1375 = vmatmul.mubr.bf16.gmra.mrb[0].mxu0 %v511
        %v1376 = vpop.f32.mrb[0].mxu0
        %v1377 = vadd.f32 %v1308, %v1376
        %v1378 = vpop.f32.mrb[0].mxu0
        %v1379 = vpop.f32.mrb[0].mxu0
        %v1380 = vadd.f32 %v1308, %v1379
        %v1381 = vpop.f32.mrb[0].mxu0
        %1382 = vmatprep.mubr.bf16.mxu0 0
        %1383 = vmatmul.mubr.bf16.gmra.mrb[0].mxu0 %v512
        %v1384 = vpop.f32.mrb[0].mxu0
        %v1385 = vadd.f32 %v1308, %v1384
        %v1386 = vpop.f32.mrb[0].mxu0
        %v1387 = vpop.f32.mrb[0].mxu0
        %v1388 = vadd.f32 %v1308, %v1387
        %v1389 = vpop.f32.mrb[0].mxu0
        %1390 = vmatprep.mubr.bf16.mxu0 0
        %1391 = vmatmul.mubr.bf16.gmra.mrb[0].mxu0 %v513
        %v1392 = vpop.f32.mrb[0].mxu0
        %v1393 = vadd.f32 %v1308, %v1392
        %v1394 = vpop.f32.mrb[0].mxu0
        %v1395 = vpop.f32.mrb[0].mxu0
        %v1396 = vadd.f32 %v1308, %v1395
        %v1397 = vpop.f32.mrb[0].mxu0
        %1398 = vmatprep.mubr.bf16.mxu0 0
        %1399 = vmatmul.mubr.bf16.gmra.mrb[0].mxu0 %v514
        %v1400 = vpop.f32.mrb[0].mxu0
        %v1401 = vadd.f32 %v1308, %v1400
        %v1402 = vpop.f32.mrb[0].mxu0
        %v1403 = vpop.f32.mrb[0].mxu0
        %v1404 = vadd.f32 %v1308, %v1403
        %v1405 = vpop.f32.mrb[0].mxu0
        %1406 = vdwg.mxu0
        %v1407 = vld [vmem:[%s440] sm:$0xf]
        %v1408 = vld [vmem:[%s440 + $0x4] sm:$0xf]
        %v1409 = vpack.c.bf16 %v1348, %v1345
        %v1410 = vpack.c.bf16 %v1356, %v1353
        %v1411 = vpack.c.bf16 %v1364, %v1361
        %v1412 = vpack.c.bf16 %v1372, %v1369
        %v1413 = vpack.c.bf16 %v1380, %v1377
        %v1414 = vpack.c.bf16 %v1388, %v1385
        %v1415 = vpack.c.bf16 %v1396, %v1393
        %v1416 = vpack.c.bf16 %v1404, %v1401
        %v1419 = vunpack.c.l.b16 %v1407
        %v1420 = vunpack.c.l.b16 %v1408
        %v1421 = vpack.c.b16 %v1420, %v1419
        %1423 = vmatprep.subr.bf16.mxu0 0
        %1424 = vmatpush1.bf16.msra.mxu0 %v1409
        %1425 = vmatprep.subr.bf16.mxu0 0
        %1426 = vmatpush1.bf16.msra.mxu0 %v1410
        %1427 = vmatprep.subr.bf16.mxu0 0
        %1428 = vmatpush1.bf16.msra.mxu0 %v1411
        %1429 = vmatprep.subr.bf16.mxu0 0
        %1430 = vmatpush1.bf16.msra.mxu0 %v1412
        %1431 = vmatprep.subr.bf16.mxu0 0
        %1432 = vmatpush1.bf16.msra.mxu0 %v1413
        %1433 = vmatprep.subr.bf16.mxu0 0
        %1434 = vmatpush1.bf16.msra.mxu0 %v1414
        %1435 = vmatprep.subr.bf16.mxu0 0
        %1436 = vmatpush1.bf16.msra.mxu0 %v1415
        %1437 = vmatprep.subr.bf16.mxu0 0
        %1438 = vmatpush1.bf16.msra.mxu0 %v1416
        %1439 = vmatprep.subr.bf16.mxu0 0
        %1440 = vmatpush1.bf16.msra.mxu0 0
        %1441 = vmatprep.subr.bf16.mxu0 0
        %1442 = vmatpush1.bf16.msra.mxu0 0
        %1443 = vmatprep.subr.bf16.mxu0 0
        %1444 = vmatpush1.bf16.msra.mxu0 0
        %1445 = vmatprep.subr.bf16.mxu0 0
        %1446 = vmatpush1.bf16.msra.mxu0 0
        %1447 = vmatprep.subr.bf16.mxu0 0
        %1448 = vmatpush1.bf16.msra.mxu0 0
        %1449 = vmatprep.subr.bf16.mxu0 0
        %1450 = vmatpush1.bf16.msra.mxu0 0
        %1451 = vmatprep.subr.bf16.mxu0 0
        %1452 = vmatpush1.bf16.msra.mxu0 0
        %1453 = vmatprep.subr.bf16.mxu0 0
        %1454 = vmatpush1.bf16.msra.mxu0 0
        %1455 = vmatprep.mubr.bf16.mxu0 0
        %1456 = vmatmul.mubr.bf16.gmra.mrb[0].mxu0 %v1421
        %v1457 = vpop.f32.mrb[0].mxu0
        %v1458 = vadd.f32 0.0, %v1457
        %v1459 = vpop.f32.mrb[0].mxu0
        %v1460 = vpop.f32.mrb[0].mxu0
        %v1461 = vadd.f32 0.0, %v1460
        %v1462 = vpop.f32.mrb[0].mxu0
        %1463 = vdwg.mxu0
        %v1464 = vpack.c.bf16 %v1461, %v1458
        %v1465 = vld [vmem:[%s9] sm:$0xf]
        %v1466 = vld [vmem:[%s9 + $0x4] sm:$0xf]
        %v1467 = vld [vmem:[%s9 + $0x8] sm:$0xf]
        %v1468 = vld [vmem:[%s9 + $0xc] sm:$0xf]
        %v1469 = vld [vmem:[%s9 + $0x10] sm:$0xf]
        %v1470 = vld [vmem:[%s9 + $0x14] sm:$0xf]
        %v1471 = vld [vmem:[%s9 + $0x18] sm:$0xf]
        %v1472 = vld [vmem:[%s9 + $0x1c] sm:$0xf]
        %s1473 = sld [smem:[#allocation2]]
        %v1474 = vstv %s1473
        %v1483 = vunpack.c.l.b16 %v1465
        %v1484 = vunpack.c.l.b16 %v1466
        %v1485 = vunpack.c.l.b16 %v1467
        %v1486 = vunpack.c.l.b16 %v1468
        %v1487 = vunpack.c.l.b16 %v1469
        %v1488 = vunpack.c.l.b16 %v1470
        %v1489 = vunpack.c.l.b16 %v1471
        %v1490 = vunpack.c.l.b16 %v1472
        %v1491 = vpack.c.b16 %v1484, %v1483
        %v1492 = vpack.c.b16 %v1486, %v1485
        %v1493 = vpack.c.b16 %v1488, %v1487
        %v1494 = vpack.c.b16 %v1490, %v1489
        %vm1499 = vcmask 523264
        %v1501 = vsel %vm1499, %v1464, 0
        %1503 = vmatprep.subr.bf16.mxu0 0
        %1504 = vmatpush1.bf16.msra.mxu0 %v1491
        %1505 = vmatprep.subr.bf16.mxu0 0
        %1506 = vmatpush1.bf16.msra.mxu0 %v1492
        %1507 = vmatprep.subr.bf16.mxu0 0
        %1508 = vmatpush1.bf16.msra.mxu0 %v1493
        %1509 = vmatprep.subr.bf16.mxu0 0
        %1510 = vmatpush1.bf16.msra.mxu0 %v1494
        %1511 = vmatprep.subr.bf16.mxu0 0
        %1512 = vmatpush1.bf16.msra.mxu0 0
        %1513 = vmatprep.subr.bf16.mxu0 0
        %1514 = vmatpush1.bf16.msra.mxu0 0
        %1515 = vmatprep.subr.bf16.mxu0 0
        %1516 = vmatpush1.bf16.msra.mxu0 0
        %1517 = vmatprep.subr.bf16.mxu0 0
        %1518 = vmatpush1.bf16.msra.mxu0 0
        %1519 = vmatprep.subr.bf16.mxu0 0
        %1520 = vmatpush1.bf16.msra.mxu0 0
        %1521 = vmatprep.subr.bf16.mxu0 0
        %1522 = vmatpush1.bf16.msra.mxu0 0
        %1523 = vmatprep.subr.bf16.mxu0 0
        %1524 = vmatpush1.bf16.msra.mxu0 0
        %1525 = vmatprep.subr.bf16.mxu0 0
        %1526 = vmatpush1.bf16.msra.mxu0 0
        %1527 = vmatprep.subr.bf16.mxu0 0
        %1528 = vmatpush1.bf16.msra.mxu0 0
        %1529 = vmatprep.subr.bf16.mxu0 0
        %1530 = vmatpush1.bf16.msra.mxu0 0
        %1531 = vmatprep.subr.bf16.mxu0 0
        %1532 = vmatpush1.bf16.msra.mxu0 0
        %1533 = vmatprep.subr.bf16.mxu0 0
        %1534 = vmatpush1.bf16.msra.mxu0 0
        %1535 = vmatprep.mubr.bf16.mxu0 0
        %1536 = vmatmul.mubr.bf16.gmra.mrb[0].mxu0 %v1501
        %v1537 = vpop.f32.mrb[0].mxu0
        %v1538 = vadd.f32 %v1474, %v1537
        %v1539 = vpop.f32.mrb[0].mxu0
        %v1540 = vpop.f32.mrb[0].mxu0
        %v1541 = vadd.f32 %v1474, %v1540
        %v1542 = vpop.f32.mrb[0].mxu0
        %1543 = vdwg.mxu0
        %1544 = vst [vmem:[%s425] sm:$0xff] %v1538
        %1545 = vst [vmem:[%s425 + $0x8] sm:$0xff] %v1541
        %s1546 = sand.u32 %s281, 1
        %s1547 = scalar_lea.sflag [#allocation5], %s1546
        %s1548 = sand.u32 %s281, 1
        %s1549 = smul.addr %s1548, 16
        %s1550 = scalar_lea.vmem [#allocation6], %s1549
        // Predicated region
        $region69: #{tpu_custom_call.1} parent=63 // pred_check
          %p1551 = pneg %p291
        $region70: #{tpu_custom_call.1} parent=63 // pred_check_branch
          %1553 = sbr.rel (%p1551) target = $region72
        $region71: #{tpu_custom_call.1} parent=63 // pred_region
          %s1554 = smul.u32 2, %s27
          %s1556 = ssub.s32 256, 256
          %1557 = vsyncadd %s1547, %s1556
          %s1558 = smul.addr %s1554, 128
          %s1559 = scalar_lea.hbm %s11, %s1558
          %s1560 = sshll.u32 %s1550, 4
          %s1561 = int_to_ptr.vmem [resolvable:$true] %s1560
          %1566 = dma.vmem_to_hbm [thread:$0]  %s1561, 256, %s1559, %s1547, 128, 128, 8
        $region72: #{tpu_custom_call.1} parent=63 // pred_fallthru
          _
      $region64: #{tpu_custom_call.1} parent=5 // pred_fallthru
        _
      %p1567 = scmp.le.s32.totalorder 2, %s22
      // Predicated region
      $region73: #{tpu_custom_call.1} parent=5 // pred_check
        %p1568 = pneg %p1567
      $region74: #{tpu_custom_call.1} parent=5 // pred_check_branch
        %1570 = sbr.rel (%p1568) target = $region76
      $region75: #{tpu_custom_call.1} parent=5 // pred_region
        %s1571 = ssub.s32 %s22, 2
        // Predicated region
        $region77: #{tpu_custom_call.1} parent=75 // pred_check
          %p1572 = pneg %p297
        $region78: #{tpu_custom_call.1} parent=75 // pred_check_branch
          %1574 = sbr.rel (%p1572) target = $region80
        $region79: #{tpu_custom_call.1} parent=75 // pred_region
          %s1575 = sand.u32 %s282, 1
          %s1576 = scalar_lea.sflag [#allocation5], %s1575
          %s1577 = sand.u32 %s282, 1
          %s1578 = smul.addr %s1577, 16
          %s1579 = scalar_lea.vmem [#allocation6], %s1578
          %1580 = dma.done %s1576, 256
        $region80: #{tpu_custom_call.1} parent=75 // pred_fallthru
          _
      $region76: #{tpu_custom_call.1} parent=5 // pred_fallthru
        _
    $region6: #{tpu_custom_call.1} parent=1 // loop_footer
      %s26 = sadd.s32 1, %s22
    $region7: #{tpu_custom_call.1} parent=1 // loop_footer_branch
      %21 = sbr.rel target = $region3
    $region8: #{tpu_custom_call.1} parent=1 // loop_exit
      _
    %1581 = vsyncpa [#allocation4], 1
    %s1582 = scalar_lea.sflag [#allocation4], 1
    %1583 = vsyncpa %s1582, 1
    %1584 = vsyncpa [#allocation5], 1
    %s1585 = scalar_lea.sflag [#allocation5], 1
    %1586 = vsyncpa %s1585, 1

</llo_original>
